<compile_context>
chip_gen: v6e
topology: v6e:2x2x1
jax: 0.10.0
libtpu: 0.0.40
codegen_flags: <defaults>
</compile_context>

<pallas_src>
import functools
import math

import jax
import jax.numpy as jnp
from jax.experimental import pallas as pl
from jax.experimental.pallas import tpu as pltpu

LN_EPS = 0.1          # nn.LayerNorm(hidden_dim, eps=0.1) in Encoder
NORM_EPS = 1e-12      # F.normalize eps

# packed-vector row indices
_ROW_ENC_BIAS, _ROW_LN1G, _ROW_LN1B = 0, 1, 2
_ROW_B2, _ROW_LN2G, _ROW_LN2B = 3, 4, 5
_ROW_B3, _ROW_LN3G, _ROW_LN3B = 6, 7, 8
_ROW_BMU = 9
_VEC_ROWS = 16   # padded row count


# ---------------------------------------------------------------------------
# Fused encoder + decoder kernel.
# Grid axis i in [0, 2K):
#   i < K           : accumulate x-tile @ enc_emb-tile and sum(x^2) into scratch
#   i == K-1        : finish the encoder MLP, write z to VMEM scratch
#   i >= K          : decoder output tile j = i - K  (z @ dec_tile.T + bias)
# ---------------------------------------------------------------------------
def _fused_kernel(x_ref, emb_ref, vec_ref, w2_ref, w3_ref, wmu_ref,
                  dec_ref, decb_ref, o_ref,
                  hacc_ref, ss_ref, z_ref,
                  *, n_enc_steps, hidden_dim, latent_dim):
    i = pl.program_id(0)
    H, L = hidden_dim, latent_dim

    @pl.when(i == 0)
    def _init():
        hacc_ref[...] = jnp.zeros_like(hacc_ref)
        ss_ref[...] = jnp.zeros_like(ss_ref)

    @pl.when(i < n_enc_steps)
    def _encode_accumulate():
        xk = x_ref[...].astype(jnp.float32)            # (B, TN)
        ek = emb_ref[...].astype(jnp.float32)          # (TN, H)
        hacc_ref[...] += jnp.dot(xk, ek, preferred_element_type=jnp.float32)
        ss_ref[...] += jnp.sum(xk * xk, axis=1, keepdims=True)

    @pl.when(i == n_enc_steps - 1)
    def _encode_finalize():
        def swish(v):
            return v * jax.nn.sigmoid(v)

        def layernorm(v, g, b):
            m = jnp.mean(v, axis=-1, keepdims=True)
            var = jnp.mean((v - m) ** 2, axis=-1, keepdims=True)
            return (v - m) / jnp.sqrt(var + LN_EPS) * g + b

        # (x / max(||x||, eps)) @ E == (x @ E) / max(||x||, eps)
        inv_norm = 1.0 / jnp.maximum(jnp.sqrt(ss_ref[...]), NORM_EPS)
        h = hacc_ref[...] * inv_norm + vec_ref[_ROW_ENC_BIAS:_ROW_ENC_BIAS + 1, :H]
        # TODO(synk): training-mode dropout / reparameterization noise omitted
        # (eval semantics: dropout is identity and z = mu).
        h1 = layernorm(swish(h),
                       vec_ref[_ROW_LN1G:_ROW_LN1G + 1, :H],
                       vec_ref[_ROW_LN1B:_ROW_LN1B + 1, :H])
        h2 = layernorm(
            swish(jnp.dot(h1, w2_ref[...].astype(jnp.float32),
                          preferred_element_type=jnp.float32)
                  + vec_ref[_ROW_B2:_ROW_B2 + 1, :H] + h1),
            vec_ref[_ROW_LN2G:_ROW_LN2G + 1, :H],
            vec_ref[_ROW_LN2B:_ROW_LN2B + 1, :H])
        h3 = layernorm(
            swish(jnp.dot(h2, w3_ref[...].astype(jnp.float32),
                          preferred_element_type=jnp.float32)
                  + vec_ref[_ROW_B3:_ROW_B3 + 1, :H] + h1 + h2),
            vec_ref[_ROW_LN3G:_ROW_LN3G + 1, :H],
            vec_ref[_ROW_LN3B:_ROW_LN3B + 1, :H])
        z_ref[...] = (jnp.dot(h3, wmu_ref[...].astype(jnp.float32),
                              preferred_element_type=jnp.float32)
                      + vec_ref[_ROW_BMU:_ROW_BMU + 1, :L])

    @pl.when(i >= n_enc_steps)
    def _decode():
        dec = dec_ref[...].astype(jnp.float32)          # (TN, L) -- no host transpose
        logits = jax.lax.dot_general(
            z_ref[...], dec, (((1,), (1,)), ((), ())),  # contract L against L (NT matmul)
            preferred_element_type=jnp.float32)
        o_ref[...] = logits + decb_ref[...]


def _pick_item_tile(n_items, max_tile):
    """Largest item tile: the whole axis if it fits, else a 128-multiple divisor."""
    if n_items <= max_tile:
        return n_items
    tile = (max_tile // 128) * 128
    while tile >= 128:
        if n_items % tile == 0:
            return tile
        tile -= 128
    raise ValueError(f"n_items={n_items} has no 128-multiple tile <= {max_tile}")


def ef_recvae_forward(user_ratings, params, *, item_tile=2048):
    B, N = user_ratings.shape
    H = params["w2"].shape[0]
    L = params["w_mu"].shape[1]
    W = max(H, L)

    TN = _pick_item_tile(N, item_tile)
    K = N // TN                       # encoder reduction steps == decoder tiles
    grid = (2 * K,)
    last_enc = K - 1

    # Pack the 10 small bias/LayerNorm vectors into a single (16, W) block.
    vec = jnp.zeros((_VEC_ROWS, W), jnp.float32)
    small_rows = (params["enc_bias"], params["ln1_g"], params["ln1_b"],
                  params["b2"], params["ln2_g"], params["ln2_b"],
                  params["b3"], params["ln3_g"], params["ln3_b"])
    for r, v in enumerate(small_rows):
        vec = vec.at[r, :H].set(v.reshape(-1).astype(jnp.float32))
    vec = vec.at[_ROW_BMU, :L].set(params["b_mu"].reshape(-1).astype(jnp.float32))

    # (N, 1) -> (1, N): contiguity-preserving reshape, not a transpose.
    dec_bias = params["dec_bias"].reshape(1, N).astype(jnp.float32)

    # Explicit VMEM budget (v7x has only 64 MiB physical): 2x for double
    # buffering of the per-step blocks + scratch + margin.
    def _nbytes(shape, itemsize):
        return math.prod(shape) * itemsize

    per_step = (_nbytes((B, TN), 4)
                + _nbytes((TN, H), params["enc_emb"].dtype.itemsize)
                + _nbytes((_VEC_ROWS, W), 4)
                + _nbytes((H, H), params["w2"].dtype.itemsize)
                + _nbytes((H, H), params["w3"].dtype.itemsize)
                + _nbytes((H, L), params["w_mu"].dtype.itemsize)
                + _nbytes((TN, L), params["dec_emb"].dtype.itemsize)
                + _nbytes((1, TN), 4)
                + _nbytes((B, TN), 4))
    scratch_bytes = 4 * (B * H + B + B * L)
    vmem_limit = min(64 * 1024 * 1024,
                     max(32 * 1024 * 1024,
                         2 * per_step + scratch_bytes + 8 * 1024 * 1024))

    kernel = functools.partial(_fused_kernel, n_enc_steps=K,
                               hidden_dim=H, latent_dim=L)

    # Index maps clamp into each phase's range so resident blocks are not
    # re-fetched across the phase boundary.
    x_spec = pl.BlockSpec((B, TN), lambda i: (0, jnp.minimum(i, last_enc)))
    emb_spec = pl.BlockSpec((TN, H), lambda i: (jnp.minimum(i, last_enc), 0))
    dec_spec = pl.BlockSpec((TN, L), lambda i: (jnp.maximum(i - K, 0), 0))
    decb_spec = pl.BlockSpec((1, TN), lambda i: (0, jnp.maximum(i - K, 0)))
    out_spec = pl.BlockSpec((B, TN), lambda i: (0, jnp.maximum(i - K, 0)))
    const = lambda shape: pl.BlockSpec(shape, lambda i: tuple(0 for _ in shape))

    x_pred = pl.pallas_call(
        kernel,
        out_shape=jax.ShapeDtypeStruct((B, N), jnp.float32),
        grid=grid,
        in_specs=[
            x_spec,                    # user ratings, item tile
            emb_spec,                  # enc_emb, item tile
            const((_VEC_ROWS, W)),     # packed biases / LN params
            const((H, H)),             # w2
            const((H, H)),             # w3
            const((H, L)),             # w_mu
            dec_spec,                  # dec_emb (N, L) item tile -- no transpose
            decb_spec,                 # dec_bias (1, N) item tile
        ],
        out_specs=out_spec,
        scratch_shapes=[pltpu.VMEM((B, H), jnp.float32),   # h accumulator
                        pltpu.VMEM((B, 1), jnp.float32),   # sum(x^2) accumulator
                        pltpu.VMEM((B, L), jnp.float32)],  # z (stays on-chip)
        # Decoder tiles depend on z produced in the encoder phase (per-core
        # scratch), so the fused axis must stay sequential ("arbitrary").
        compiler_params=pltpu.CompilerParams(
            dimension_semantics=("arbitrary",),
            vmem_limit_bytes=int(vmem_limit)),
    )(user_ratings, params["enc_emb"], vec, params["w2"], params["w3"],
      params["w_mu"], params["dec_emb"], dec_bias)

    return x_pred


ef_recvae_forward_jit = jax.jit(ef_recvae_forward, static_argnames=("item_tile",))


# ---------------------------------------------------------------------------
# Deterministic parameter construction (synthetic, xavier-normal-ish scales)
# ---------------------------------------------------------------------------
def make_params(key, n_items, hidden_dim, latent_dim):
    ks = jax.random.split(key, 12)
    xav = lambda k, fan_in, fan_out, shape: (
        jax.random.normal(k, shape, jnp.float32)
        * jnp.sqrt(2.0 / (fan_in + fan_out)))
    return {
        "enc_emb": xav(ks[0], n_items, hidden_dim, (n_items, hidden_dim)),
        "enc_bias": 0.001 * jax.random.normal(ks[1], (1, hidden_dim), jnp.float32),
        "ln1_g": jnp.ones((1, hidden_dim), jnp.float32),
        "ln1_b": jnp.zeros((1, hidden_dim), jnp.float32),
        "w2": xav(ks[2], hidden_dim, hidden_dim, (hidden_dim, hidden_dim)),
        "b2": 0.001 * jax.random.normal(ks[3], (1, hidden_dim), jnp.float32),
        "ln2_g": jnp.ones((1, hidden_dim), jnp.float32),
        "ln2_b": jnp.zeros((1, hidden_dim), jnp.float32),
        "w3": xav(ks[4], hidden_dim, hidden_dim, (hidden_dim, hidden_dim)),
        "b3": 0.001 * jax.random.normal(ks[5], (1, hidden_dim), jnp.float32),
        "ln3_g": jnp.ones((1, hidden_dim), jnp.float32),
        "ln3_b": jnp.zeros((1, hidden_dim), jnp.float32),
        "w_mu": xav(ks[6], hidden_dim, latent_dim, (hidden_dim, latent_dim)),
        "b_mu": 0.001 * jax.random.normal(ks[7], (1, latent_dim), jnp.float32),
        "dec_emb": xav(ks[8], n_items, latent_dim, (n_items, latent_dim)),
        "dec_bias": 0.001 * jax.random.normal(ks[9], (n_items, 1), jnp.float32),
    }


# ---------------------------------------------------------------------------
# Pure-JAX reference (mirrors the PyTorch eval-mode forward)
# ---------------------------------------------------------------------------
def reference_forward(x, p):
    f32 = lambda a: a.astype(jnp.float32)
    xn = x / jnp.maximum(jnp.linalg.norm(x, axis=1, keepdims=True), NORM_EPS)
    swish = lambda v: v * jax.nn.sigmoid(v)
    ln = lambda v, g, b: (v - v.mean(-1, keepdims=True)) / jnp.sqrt(
        v.var(-1, keepdims=True) + LN_EPS) * g + b
    h = xn @ f32(p["enc_emb"]) + p["enc_bias"]
    h1 = ln(swish(h), p["ln1_g"], p["ln1_b"])
    h2 = ln(swish(h1 @ f32(p["w2"]) + p["b2"] + h1), p["ln2_g"], p["ln2_b"])
    h3 = ln(swish(h2 @ f32(p["w3"]) + p["b3"] + h1 + h2), p["ln3_g"], p["ln3_b"])
    z = h3 @ f32(p["w_mu"]) + p["b_mu"]
    return z @ f32(p["dec_emb"]).T + p["dec_bias"].T


if __name__ == "__main__":
    B, N_ITEMS, HIDDEN, LATENT = 8, 512, 64, 32

    key = jax.random.PRNGKey(0)
    k_x, k_p = jax.random.split(key)
    params = make_params(k_p, N_ITEMS, HIDDEN, LATENT)

    # implicit-feedback user ratings: binary 0/1 matrix, float32
    user_ratings = (jax.random.uniform(k_x, (B, N_ITEMS)) < 0.1).astype(jnp.float32)

    ref = reference_forward(user_ratings, params)

    # 1) single-tile path: whole item axis in one block (grid = 2 steps)
    out_full = jax.block_until_ready(
        ef_recvae_forward_jit(user_ratings, params))
    assert out_full.shape == (B, N_ITEMS)
    assert jnp.allclose(out_full, ref, rtol=1e-4, atol=1e-4), "mismatch (full tile)"

    # 2) multi-tile path: encoder item-axis reduction + tiled decoder
    out_tiled = jax.block_until_ready(
        ef_recvae_forward_jit(user_ratings, params, item_tile=128))
    assert jnp.allclose(out_tiled, ref, rtol=1e-4, atol=1e-4), "mismatch (tiled)"

    # 3) bf16 weight storage (halves HBM traffic for the big embeddings).
    #    Reference uses the same bf16-rounded weights, accumulation stays f32.
    params_bf16 = dict(params)
    for name in ("enc_emb", "dec_emb", "w2", "w3", "w_mu"):
        params_bf16[name] = params[name].astype(jnp.bfloat16)
    ref_bf16 = reference_forward(user_ratings, params_bf16)
    out_bf16 = jax.block_until_ready(
        ef_recvae_forward_jit(user_ratings, params_bf16))
    assert jnp.allclose(out_bf16, ref_bf16, rtol=1e-4, atol=1e-4), "mismatch (bf16 weights)"

    print("KERNEL_OK")
</pallas_src>

<mosaic_0001>
module attributes {stable_mosaic.version = 11 : i64} {
  func.func @_fused_kernel(%arg0: i32, %arg1: memref<8x512xf32, #tpu.memory_space<vmem>>, %arg2: memref<512x64xf32, #tpu.memory_space<vmem>>, %arg3: memref<16x64xf32, #tpu.memory_space<vmem>>, %arg4: memref<64x64xf32, #tpu.memory_space<vmem>>, %arg5: memref<64x64xf32, #tpu.memory_space<vmem>>, %arg6: memref<64x32xf32, #tpu.memory_space<vmem>>, %arg7: memref<512x32xf32, #tpu.memory_space<vmem>>, %arg8: memref<1x512xf32, #tpu.memory_space<vmem>>, %arg9: memref<8x512xf32, #tpu.memory_space<vmem>>, %arg10: memref<8x64xf32, #tpu.memory_space<vmem>>, %arg11: memref<8x1xf32, #tpu.memory_space<vmem>>, %arg12: memref<8x32xf32, #tpu.memory_space<vmem>>) attributes {dimension_semantics = [#tpu.dimension_semantics<arbitrary>], iteration_bounds = array<i64: 2>, scalar_prefetch = 0 : i64, scratch_operands = 3 : i64, tpu.core_type = #tpu.core_type<tc>, window_params = [{transform_indices = @transform_0, window_bounds = array<i64: 8, 512>}, {transform_indices = @transform_1, window_bounds = array<i64: 512, 64>}, {pipeline_mode = #tpu.pipeline_mode<synchronous>, transform_indices = @transform_2, window_bounds = array<i64: 16, 64>}, {pipeline_mode = #tpu.pipeline_mode<synchronous>, transform_indices = @transform_3, window_bounds = array<i64: 64, 64>}, {pipeline_mode = #tpu.pipeline_mode<synchronous>, transform_indices = @transform_4, window_bounds = array<i64: 64, 64>}, {pipeline_mode = #tpu.pipeline_mode<synchronous>, transform_indices = @transform_5, window_bounds = array<i64: 64, 32>}, {transform_indices = @transform_6, window_bounds = array<i64: 512, 32>}, {transform_indices = @transform_7, window_bounds = array<i64: 1, 512>}, {transform_indices = @transform_8, window_bounds = array<i64: 8, 512>}]} {
    %c0_i32 = arith.constant 0 : i32
    %0 = arith.cmpi eq, %arg0, %c0_i32 : i32
    %1 = arith.extui %0 : i1 to i32
    %c0_i32_0 = arith.constant 0 : i32
    %2 = arith.cmpi ne, %1, %c0_i32_0 : i32
    scf.if %2 {
      %cst = arith.constant 0.000000e+00 : f32
      %12 = vector.broadcast %cst : f32 to vector<8x64xf32>
      %c0 = arith.constant 0 : index
      %c0_6 = arith.constant 0 : index
      %13 = vector.load %arg10[%c0, %c0_6] : memref<8x64xf32, #tpu.memory_space<vmem>>, vector<8x64xf32>
      tpu.vector_store %arg10[%c0, %c0_6], %12 {strides = array<i32>} : memref<8x64xf32, #tpu.memory_space<vmem>>, vector<8x64xf32>,
      %cst_7 = arith.constant 0.000000e+00 : f32
      %14 = vector.broadcast %cst_7 : f32 to vector<8x1xf32>
      %c0_8 = arith.constant 0 : index
      %c0_9 = arith.constant 0 : index
      %15 = vector.load %arg11[%c0_8, %c0_9] : memref<8x1xf32, #tpu.memory_space<vmem>>, vector<8x1xf32>
      tpu.vector_store %arg11[%c0_8, %c0_9], %14 {strides = array<i32>} : memref<8x1xf32, #tpu.memory_space<vmem>>, vector<8x1xf32>,
    } else {
    }
    %c1_i32 = arith.constant 1 : i32
    %3 = arith.cmpi slt, %arg0, %c1_i32 : i32
    %4 = arith.extui %3 : i1 to i32
    %c0_i32_1 = arith.constant 0 : i32
    %5 = arith.cmpi ne, %4, %c0_i32_1 : i32
    scf.if %5 {
      %c0 = arith.constant 0 : index
      %c0_6 = arith.constant 0 : index
      %12 = vector.load %arg1[%c0, %c0_6] : memref<8x512xf32, #tpu.memory_space<vmem>>, vector<8x512xf32>
      %c0_7 = arith.constant 0 : index
      %c0_8 = arith.constant 0 : index
      %13 = vector.load %arg2[%c0_7, %c0_8] : memref<512x64xf32, #tpu.memory_space<vmem>>, vector<512x64xf32>
      %c0_9 = arith.constant 0 : index
      %c0_10 = arith.constant 0 : index
      %14 = vector.load %arg10[%c0_9, %c0_10] : memref<8x64xf32, #tpu.memory_space<vmem>>, vector<8x64xf32>
      %cst = arith.constant dense<0.000000e+00> : vector<8x64xf32>
      %15 = tpu.matmul %12, %13, %cst {dimension_numbers = #tpu.dot_dimension_numbers<[1], [0], [0], [1], [0, 0, 1, 1], [], []>} : vector<8x512xf32>, vector<512x64xf32>, vector<8x64xf32> -> vector<8x64xf32>
      %16 = arith.addf %14, %15 : vector<8x64xf32>
      %c0_11 = arith.constant 0 : index
      %c0_12 = arith.constant 0 : index
      %17 = vector.load %arg10[%c0_11, %c0_12] : memref<8x64xf32, #tpu.memory_space<vmem>>, vector<8x64xf32>
      tpu.vector_store %arg10[%c0_11, %c0_12], %16 {strides = array<i32>} : memref<8x64xf32, #tpu.memory_space<vmem>>, vector<8x64xf32>,
      %c0_13 = arith.constant 0 : index
      %c0_14 = arith.constant 0 : index
      %18 = vector.load %arg11[%c0_13, %c0_14] : memref<8x1xf32, #tpu.memory_space<vmem>>, vector<8x1xf32>
      %19 = arith.mulf %12, %12 : vector<8x512xf32>
      %cst_15 = arith.constant dense<0.000000e+00> : vector<8xf32>
      %20 = vector.multi_reduction <add>, %19, %cst_15 [1] : vector<8x512xf32> to vector<8xf32>
      %21 = vector.shape_cast %20 : vector<8xf32> to vector<8x1xf32>
      %22 = arith.addf %18, %21 : vector<8x1xf32>
      %c0_16 = arith.constant 0 : index
      %c0_17 = arith.constant 0 : index
      %23 = vector.load %arg11[%c0_16, %c0_17] : memref<8x1xf32, #tpu.memory_space<vmem>>, vector<8x1xf32>
      tpu.vector_store %arg11[%c0_16, %c0_17], %22 {strides = array<i32>} : memref<8x1xf32, #tpu.memory_space<vmem>>, vector<8x1xf32>,
    } else {
    }
    %c0_i32_2 = arith.constant 0 : i32
    %6 = arith.cmpi eq, %arg0, %c0_i32_2 : i32
    %7 = arith.extui %6 : i1 to i32
    %c0_i32_3 = arith.constant 0 : i32
    %8 = arith.cmpi ne, %7, %c0_i32_3 : i32
    scf.if %8 {
      %c0 = arith.constant 0 : index
      %c0_6 = arith.constant 0 : index
      %12 = vector.load %arg11[%c0, %c0_6] : memref<8x1xf32, #tpu.memory_space<vmem>>, vector<8x1xf32>
      %13 = math.sqrt %12 : vector<8x1xf32>
      %cst = arith.constant 9.99999996E-13 : f32
      %14 = vector.broadcast %cst : f32 to vector<8x1xf32>
      %15 = arith.maximumf %13, %14 : vector<8x1xf32>
      %cst_7 = arith.constant 1.000000e+00 : f32
      %16 = vector.broadcast %cst_7 : f32 to vector<8x1xf32>
      %17 = arith.divf %16, %15 : vector<8x1xf32>
      %c0_8 = arith.constant 0 : index
      %c0_9 = arith.constant 0 : index
      %18 = vector.load %arg10[%c0_8, %c0_9] : memref<8x64xf32, #tpu.memory_space<vmem>>, vector<8x64xf32>
      %19 = vector.broadcast %17 : vector<8x1xf32> to vector<8x64xf32>
      %20 = arith.mulf %18, %19 : vector<8x64xf32>
      %c0_10 = arith.constant 0 : index
      %c0_11 = arith.constant 0 : index
      %21 = vector.load %arg3[%c0_10, %c0_11] : memref<16x64xf32, #tpu.memory_space<vmem>>, vector<1x64xf32>
      %22 = vector.broadcast %21 : vector<1x64xf32> to vector<8x64xf32>
      %23 = arith.addf %20, %22 : vector<8x64xf32>
      %24 = arith.negf %23 : vector<8x64xf32>
      %25 = math.exp %24 : vector<8x64xf32>
      %cst_12 = arith.constant 1.000000e+00 : f32
      %26 = vector.broadcast %cst_12 : f32 to vector<8x64xf32>
      %27 = arith.addf %26, %25 : vector<8x64xf32>
      %28 = arith.divf %26, %27 : vector<8x64xf32>
      %29 = arith.mulf %23, %28 : vector<8x64xf32>
      %c1 = arith.constant 1 : index
      %c0_13 = arith.constant 0 : index
      %30 = vector.load %arg3[%c1, %c0_13] : memref<16x64xf32, #tpu.memory_space<vmem>>, vector<1x64xf32>
      %c2 = arith.constant 2 : index
      %c0_14 = arith.constant 0 : index
      %31 = vector.load %arg3[%c2, %c0_14] : memref<16x64xf32, #tpu.memory_space<vmem>>, vector<1x64xf32>
      %cst_15 = arith.constant dense<0.000000e+00> : vector<8xf32>
      %32 = vector.multi_reduction <add>, %29, %cst_15 [1] : vector<8x64xf32> to vector<8xf32>
      %33 = vector.shape_cast %32 : vector<8xf32> to vector<8x1xf32>
      %cst_16 = arith.constant 6.400000e+01 : f32
      %34 = vector.broadcast %cst_16 : f32 to vector<8x1xf32>
      %35 = arith.divf %33, %34 : vector<8x1xf32>
      %36 = vector.broadcast %35 : vector<8x1xf32> to vector<8x64xf32>
      %37 = arith.subf %29, %36 : vector<8x64xf32>
      %38 = arith.mulf %37, %37 : vector<8x64xf32>
      %cst_17 = arith.constant dense<0.000000e+00> : vector<8xf32>
      %39 = vector.multi_reduction <add>, %38, %cst_17 [1] : vector<8x64xf32> to vector<8xf32>
      %40 = vector.shape_cast %39 : vector<8xf32> to vector<8x1xf32>
      %cst_18 = arith.constant 6.400000e+01 : f32
      %41 = vector.broadcast %cst_18 : f32 to vector<8x1xf32>
      %42 = arith.divf %40, %41 : vector<8x1xf32>
      %43 = vector.broadcast %35 : vector<8x1xf32> to vector<8x64xf32>
      %44 = arith.subf %29, %43 : vector<8x64xf32>
      %cst_19 = arith.constant 1.000000e-01 : f32
      %45 = vector.broadcast %cst_19 : f32 to vector<8x1xf32>
      %46 = arith.addf %42, %45 : vector<8x1xf32>
      %47 = math.sqrt %46 : vector<8x1xf32>
      %48 = vector.broadcast %47 : vector<8x1xf32> to vector<8x64xf32>
      %49 = arith.divf %44, %48 : vector<8x64xf32>
      %50 = vector.broadcast %30 : vector<1x64xf32> to vector<8x64xf32>
      %51 = arith.mulf %49, %50 : vector<8x64xf32>
      %52 = vector.broadcast %31 : vector<1x64xf32> to vector<8x64xf32>
      %53 = arith.addf %51, %52 : vector<8x64xf32>
      %c0_20 = arith.constant 0 : index
      %c0_21 = arith.constant 0 : index
      %54 = vector.load %arg4[%c0_20, %c0_21] : memref<64x64xf32, #tpu.memory_space<vmem>>, vector<64x64xf32>
      %cst_22 = arith.constant dense<0.000000e+00> : vector<8x64xf32>
      %55 = tpu.matmul %53, %54, %cst_22 {dimension_numbers = #tpu.dot_dimension_numbers<[1], [0], [0], [1], [0, 0, 1, 1], [], []>} : vector<8x64xf32>, vector<64x64xf32>, vector<8x64xf32> -> vector<8x64xf32>
      %c3 = arith.constant 3 : index
      %c0_23 = arith.constant 0 : index
      %56 = vector.load %arg3[%c3, %c0_23] : memref<16x64xf32, #tpu.memory_space<vmem>>, vector<1x64xf32>
      %57 = vector.broadcast %56 : vector<1x64xf32> to vector<8x64xf32>
      %58 = arith.addf %55, %57 : vector<8x64xf32>
      %59 = arith.addf %58, %53 : vector<8x64xf32>
      %60 = arith.negf %59 : vector<8x64xf32>
      %61 = math.exp %60 : vector<8x64xf32>
      %cst_24 = arith.constant 1.000000e+00 : f32
      %62 = vector.broadcast %cst_24 : f32 to vector<8x64xf32>
      %63 = arith.addf %62, %61 : vector<8x64xf32>
      %64 = arith.divf %62, %63 : vector<8x64xf32>
      %65 = arith.mulf %59, %64 : vector<8x64xf32>
      %c4 = arith.constant 4 : index
      %c0_25 = arith.constant 0 : index
      %66 = vector.load %arg3[%c4, %c0_25] : memref<16x64xf32, #tpu.memory_space<vmem>>, vector<1x64xf32>
      %c5 = arith.constant 5 : index
      %c0_26 = arith.constant 0 : index
      %67 = vector.load %arg3[%c5, %c0_26] : memref<16x64xf32, #tpu.memory_space<vmem>>, vector<1x64xf32>
      %cst_27 = arith.constant dense<0.000000e+00> : vector<8xf32>
      %68 = vector.multi_reduction <add>, %65, %cst_27 [1] : vector<8x64xf32> to vector<8xf32>
      %69 = vector.shape_cast %68 : vector<8xf32> to vector<8x1xf32>
      %cst_28 = arith.constant 6.400000e+01 : f32
      %70 = vector.broadcast %cst_28 : f32 to vector<8x1xf32>
      %71 = arith.divf %69, %70 : vector<8x1xf32>
      %72 = vector.broadcast %71 : vector<8x1xf32> to vector<8x64xf32>
      %73 = arith.subf %65, %72 : vector<8x64xf32>
      %74 = arith.mulf %73, %73 : vector<8x64xf32>
      %cst_29 = arith.constant dense<0.000000e+00> : vector<8xf32>
      %75 = vector.multi_reduction <add>, %74, %cst_29 [1] : vector<8x64xf32> to vector<8xf32>
      %76 = vector.shape_cast %75 : vector<8xf32> to vector<8x1xf32>
      %cst_30 = arith.constant 6.400000e+01 : f32
      %77 = vector.broadcast %cst_30 : f32 to vector<8x1xf32>
      %78 = arith.divf %76, %77 : vector<8x1xf32>
      %79 = vector.broadcast %71 : vector<8x1xf32> to vector<8x64xf32>
      %80 = arith.subf %65, %79 : vector<8x64xf32>
      %cst_31 = arith.constant 1.000000e-01 : f32
      %81 = vector.broadcast %cst_31 : f32 to vector<8x1xf32>
      %82 = arith.addf %78, %81 : vector<8x1xf32>
      %83 = math.sqrt %82 : vector<8x1xf32>
      %84 = vector.broadcast %83 : vector<8x1xf32> to vector<8x64xf32>
      %85 = arith.divf %80, %84 : vector<8x64xf32>
      %86 = vector.broadcast %66 : vector<1x64xf32> to vector<8x64xf32>
      %87 = arith.mulf %85, %86 : vector<8x64xf32>
      %88 = vector.broadcast %67 : vector<1x64xf32> to vector<8x64xf32>
      %89 = arith.addf %87, %88 : vector<8x64xf32>
      %c0_32 = arith.constant 0 : index
      %c0_33 = arith.constant 0 : index
      %90 = vector.load %arg5[%c0_32, %c0_33] : memref<64x64xf32, #tpu.memory_space<vmem>>, vector<64x64xf32>
      %cst_34 = arith.constant dense<0.000000e+00> : vector<8x64xf32>
      %91 = tpu.matmul %89, %90, %cst_34 {dimension_numbers = #tpu.dot_dimension_numbers<[1], [0], [0], [1], [0, 0, 1, 1], [], []>} : vector<8x64xf32>, vector<64x64xf32>, vector<8x64xf32> -> vector<8x64xf32>
      %c6 = arith.constant 6 : index
      %c0_35 = arith.constant 0 : index
      %92 = vector.load %arg3[%c6, %c0_35] : memref<16x64xf32, #tpu.memory_space<vmem>>, vector<1x64xf32>
      %93 = vector.broadcast %92 : vector<1x64xf32> to vector<8x64xf32>
      %94 = arith.addf %91, %93 : vector<8x64xf32>
      %95 = arith.addf %94, %53 : vector<8x64xf32>
      %96 = arith.addf %95, %89 : vector<8x64xf32>
      %97 = arith.negf %96 : vector<8x64xf32>
      %98 = math.exp %97 : vector<8x64xf32>
      %cst_36 = arith.constant 1.000000e+00 : f32
      %99 = vector.broadcast %cst_36 : f32 to vector<8x64xf32>
      %100 = arith.addf %99, %98 : vector<8x64xf32>
      %101 = arith.divf %99, %100 : vector<8x64xf32>
      %102 = arith.mulf %96, %101 : vector<8x64xf32>
      %c7 = arith.constant 7 : index
      %c0_37 = arith.constant 0 : index
      %103 = vector.load %arg3[%c7, %c0_37] : memref<16x64xf32, #tpu.memory_space<vmem>>, vector<1x64xf32>
      %c8 = arith.constant 8 : index
      %c0_38 = arith.constant 0 : index
      %104 = vector.load %arg3[%c8, %c0_38] : memref<16x64xf32, #tpu.memory_space<vmem>>, vector<1x64xf32>
      %cst_39 = arith.constant dense<0.000000e+00> : vector<8xf32>
      %105 = vector.multi_reduction <add>, %102, %cst_39 [1] : vector<8x64xf32> to vector<8xf32>
      %106 = vector.shape_cast %105 : vector<8xf32> to vector<8x1xf32>
      %cst_40 = arith.constant 6.400000e+01 : f32
      %107 = vector.broadcast %cst_40 : f32 to vector<8x1xf32>
      %108 = arith.divf %106, %107 : vector<8x1xf32>
      %109 = vector.broadcast %108 : vector<8x1xf32> to vector<8x64xf32>
      %110 = arith.subf %102, %109 : vector<8x64xf32>
      %111 = arith.mulf %110, %110 : vector<8x64xf32>
      %cst_41 = arith.constant dense<0.000000e+00> : vector<8xf32>
      %112 = vector.multi_reduction <add>, %111, %cst_41 [1] : vector<8x64xf32> to vector<8xf32>
      %113 = vector.shape_cast %112 : vector<8xf32> to vector<8x1xf32>
      %cst_42 = arith.constant 6.400000e+01 : f32
      %114 = vector.broadcast %cst_42 : f32 to vector<8x1xf32>
      %115 = arith.divf %113, %114 : vector<8x1xf32>
      %116 = vector.broadcast %108 : vector<8x1xf32> to vector<8x64xf32>
      %117 = arith.subf %102, %116 : vector<8x64xf32>
      %cst_43 = arith.constant 1.000000e-01 : f32
      %118 = vector.broadcast %cst_43 : f32 to vector<8x1xf32>
      %119 = arith.addf %115, %118 : vector<8x1xf32>
      %120 = math.sqrt %119 : vector<8x1xf32>
      %121 = vector.broadcast %120 : vector<8x1xf32> to vector<8x64xf32>
      %122 = arith.divf %117, %121 : vector<8x64xf32>
      %123 = vector.broadcast %103 : vector<1x64xf32> to vector<8x64xf32>
      %124 = arith.mulf %122, %123 : vector<8x64xf32>
      %125 = vector.broadcast %104 : vector<1x64xf32> to vector<8x64xf32>
      %126 = arith.addf %124, %125 : vector<8x64xf32>
      %c0_44 = arith.constant 0 : index
      %c0_45 = arith.constant 0 : index
      %127 = vector.load %arg6[%c0_44, %c0_45] : memref<64x32xf32, #tpu.memory_space<vmem>>, vector<64x32xf32>
      %cst_46 = arith.constant dense<0.000000e+00> : vector<8x32xf32>
      %128 = tpu.matmul %126, %127, %cst_46 {dimension_numbers = #tpu.dot_dimension_numbers<[1], [0], [0], [1], [0, 0, 1, 1], [], []>} : vector<8x64xf32>, vector<64x32xf32>, vector<8x32xf32> -> vector<8x32xf32>
      %c9 = arith.constant 9 : index
      %c0_47 = arith.constant 0 : index
      %129 = vector.load %arg3[%c9, %c0_47] : memref<16x64xf32, #tpu.memory_space<vmem>>, vector<1x32xf32>
      %130 = vector.broadcast %129 : vector<1x32xf32> to vector<8x32xf32>
      %131 = arith.addf %128, %130 : vector<8x32xf32>
      %c0_48 = arith.constant 0 : index
      %c0_49 = arith.constant 0 : index
      %132 = vector.load %arg12[%c0_48, %c0_49] : memref<8x32xf32, #tpu.memory_space<vmem>>, vector<8x32xf32>
      tpu.vector_store %arg12[%c0_48, %c0_49], %131 {strides = array<i32>} : memref<8x32xf32, #tpu.memory_space<vmem>>, vector<8x32xf32>,
    } else {
    }
    %c1_i32_4 = arith.constant 1 : i32
    %9 = arith.cmpi sge, %arg0, %c1_i32_4 : i32
    %10 = arith.extui %9 : i1 to i32
    %c0_i32_5 = arith.constant 0 : i32
    %11 = arith.cmpi ne, %10, %c0_i32_5 : i32
    scf.if %11 {
      %c0 = arith.constant 0 : index
      %c0_6 = arith.constant 0 : index
      %12 = vector.load %arg7[%c0, %c0_6] : memref<512x32xf32, #tpu.memory_space<vmem>>, vector<512x32xf32>
      %c0_7 = arith.constant 0 : index
      %c0_8 = arith.constant 0 : index
      %13 = vector.load %arg12[%c0_7, %c0_8] : memref<8x32xf32, #tpu.memory_space<vmem>>, vector<8x32xf32>
      %cst = arith.constant dense<0.000000e+00> : vector<8x512xf32>
      %14 = tpu.matmul %13, %12, %cst {dimension_numbers = #tpu.dot_dimension_numbers<[1], [1], [0], [0], [0, 0, 1, 0], [], []>} : vector<8x32xf32>, vector<512x32xf32>, vector<8x512xf32> -> vector<8x512xf32>
      %c0_9 = arith.constant 0 : index
      %c0_10 = arith.constant 0 : index
      %15 = vector.load %arg8[%c0_9, %c0_10] : memref<1x512xf32, #tpu.memory_space<vmem>>, vector<1x512xf32>
      %16 = vector.broadcast %15 : vector<1x512xf32> to vector<8x512xf32>
      %17 = arith.addf %14, %16 : vector<8x512xf32>
      %c0_11 = arith.constant 0 : index
      %c0_12 = arith.constant 0 : index
      %18 = vector.load %arg9[%c0_11, %c0_12] : memref<8x512xf32, #tpu.memory_space<vmem>>, vector<8x512xf32>
      tpu.vector_store %arg9[%c0_11, %c0_12], %17 {strides = array<i32>} : memref<8x512xf32, #tpu.memory_space<vmem>>, vector<8x512xf32>,
    } else {
    }
    return
  }
  func.func @transform_0(%arg0: i32) -> (i32, i32) {
    %c0_i32 = arith.constant 0 : i32
    %0 = arith.minsi %arg0, %c0_i32 : i32
    %c0_i32_0 = arith.constant 0 : i32
    %c0_i32_1 = arith.constant 0 : i32
    return %c0_i32_0, %0 : i32, i32
  }
  func.func @transform_1(%arg0: i32) -> (i32, i32) {
    %c0_i32 = arith.constant 0 : i32
    %0 = arith.minsi %arg0, %c0_i32 : i32
    %c0_i32_0 = arith.constant 0 : i32
    %c0_i32_1 = arith.constant 0 : i32
    return %0, %c0_i32_0 : i32, i32
  }
  func.func @transform_2(%arg0: i32) -> (i32, i32) {
    %c0_i32 = arith.constant 0 : i32
    %c0_i32_0 = arith.constant 0 : i32
    %c0_i32_1 = arith.constant 0 : i32
    return %c0_i32, %c0_i32_0 : i32, i32
  }
  func.func @transform_3(%arg0: i32) -> (i32, i32) {
    %c0_i32 = arith.constant 0 : i32
    %c0_i32_0 = arith.constant 0 : i32
    %c0_i32_1 = arith.constant 0 : i32
    return %c0_i32, %c0_i32_0 : i32, i32
  }
  func.func @transform_4(%arg0: i32) -> (i32, i32) {
    %c0_i32 = arith.constant 0 : i32
    %c0_i32_0 = arith.constant 0 : i32
    %c0_i32_1 = arith.constant 0 : i32
    return %c0_i32, %c0_i32_0 : i32, i32
  }
  func.func @transform_5(%arg0: i32) -> (i32, i32) {
    %c0_i32 = arith.constant 0 : i32
    %c0_i32_0 = arith.constant 0 : i32
    %c0_i32_1 = arith.constant 0 : i32
    return %c0_i32, %c0_i32_0 : i32, i32
  }
  func.func @transform_6(%arg0: i32) -> (i32, i32) {
    %c1_i32 = arith.constant 1 : i32
    %0 = arith.subi %arg0, %c1_i32 : i32
    %c0_i32 = arith.constant 0 : i32
    %1 = arith.maxsi %0, %c0_i32 : i32
    %c0_i32_0 = arith.constant 0 : i32
    %c0_i32_1 = arith.constant 0 : i32
    return %1, %c0_i32_0 : i32, i32
  }
  func.func @transform_7(%arg0: i32) -> (i32, i32) {
    %c1_i32 = arith.constant 1 : i32
    %0 = arith.subi %arg0, %c1_i32 : i32
    %c0_i32 = arith.constant 0 : i32
    %1 = arith.maxsi %0, %c0_i32 : i32
    %c0_i32_0 = arith.constant 0 : i32
    %c0_i32_1 = arith.constant 0 : i32
    return %c0_i32_0, %1 : i32, i32
  }
  func.func @transform_8(%arg0: i32) -> (i32, i32) {
    %c1_i32 = arith.constant 1 : i32
    %0 = arith.subi %arg0, %c1_i32 : i32
    %c0_i32 = arith.constant 0 : i32
    %1 = arith.maxsi %0, %c0_i32 : i32
    %c0_i32_0 = arith.constant 0 : i32
    %c0_i32_1 = arith.constant 0 : i32
    return %c0_i32_0, %1 : i32, i32
  }
}

</mosaic_0001>

<llo_original>
// kernel: ef_recvae_forward.1
$region0: #{ef_recvae_forward.1}
  #allocation0 [shape = 'u32[]', space=smem, size = 0x4, offset = 0x4, fixed_abs, tag = 'smem constant byte address 0x4 - core index']
  #allocation1 [shape = 'u32[144,128]{1,0:T(1,128)}', space=vmem, size = 0x12000, scoped, tag = 'internal scratch']
  #allocation2 [shape = 'f32[8,64]{1,0:T(8,128)}', space=vmem, size = 0x1000, scoped, tag = 'scratch operand']
  #allocation3 [shape = 'f32[8,1]{1,0:T(8,128)}', space=vmem, size = 0x1000, scoped, tag = 'scratch operand']
  #allocation4 [shape = 'f32[8,32]{1,0:T(8,128)}', space=vmem, size = 0x1000, scoped, tag = 'scratch operand']
  %s0 = inlined_call_operand.vmem [shape: f32[8,512], index: 0, kind: input, shape index: {}]
  %s1 = inlined_call_operand.vmem [shape: f32[512,64], index: 1, kind: input, shape index: {}]
  %s2 = inlined_call_operand.vmem [shape: f32[16,64], index: 2, kind: input, shape index: {}]
  %s3 = inlined_call_operand.vmem [shape: f32[64,64], index: 3, kind: input, shape index: {}]
  %s4 = inlined_call_operand.vmem [shape: f32[64,64], index: 4, kind: input, shape index: {}]
  %s5 = inlined_call_operand.vmem [shape: f32[64,32], index: 5, kind: input, shape index: {}]
  %s6 = inlined_call_operand.vmem [shape: f32[512,32], index: 6, kind: input, shape index: {}]
  %s7 = inlined_call_operand.vmem [shape: f32[1,512], index: 7, kind: input, shape index: {}]
  %s8 = inlined_call_operand.hbm [shape: f32[8,512], index: 8, kind: output, shape index: {}]
  %s9 = sld [smem:[#allocation0]]
  $region81: #{ef_recvae_forward.1} parent=0
    _
  %s11 = ssub.s32 1, %s9
  %s12 = scalar_select 0, %s11, %s9
  $region1: #{ef_recvae_forward.1} parent=0
    #allocation5 [shape = 'u8[32768]{0}', space=vmem, size = 0x8000, scoped, tag = 'output window, operand 0']
    #allocation6 [shape = 's32[2]{0}', space=sflag, size = 0x8, scoped, tag = 'scoped memory for ef_recvae_forward.1']
    %13 = vsyncpa [#allocation6], 0
    %s14 = scalar_lea.sflag [#allocation6], 1
    %15 = vsyncpa %s14, 0
    loop: start=0, step=1, limit=4
    $region2: #{ef_recvae_forward.1} parent=1 // loop_pre_header
      _
    $region3: #{ef_recvae_forward.1} parent=1 // loop_header
      %s17 = sphi 0, %s21
      %p18 = scmp.ge.s32.totalorder %s17, 4
      %s31 = sphi 0, %s33
      %s34 = sphi 0, %s31
      %s35 = sphi 0, %s34
      %s51 = sphi 0, %s35
      %s61 = sphi 0, %s63
      %s64 = sphi 0, %s61
      %s65 = sphi 0, %s64
      %s81 = sphi 0, %s65
      %s85 = sphi 0, %s85
      %s87 = sphi 0, %s85
      %s88 = sphi 0, %s87
      %s102 = sphi 0, %s88
      %s106 = sphi 0, %s106
      %s108 = sphi 0, %s106
      %s109 = sphi 0, %s108
      %s123 = sphi 0, %s109
      %s127 = sphi 0, %s127
      %s129 = sphi 0, %s127
      %s130 = sphi 0, %s129
      %s144 = sphi 0, %s130
      %s148 = sphi 0, %s148
      %s150 = sphi 0, %s148
      %s151 = sphi 0, %s150
      %s165 = sphi 0, %s151
      %s177 = sphi 0, %s179
      %s180 = sphi 0, %s177
      %s181 = sphi 0, %s180
      %s197 = sphi 0, %s181
      %s209 = sphi 0, %s211
      %s212 = sphi 0, %s209
      %s213 = sphi 0, %s212
      %s229 = sphi 0, %s213
      %s241 = sphi 0, %s243
      %s244 = sphi 0, %s241
      %s245 = sphi 0, %s244
      %s261 = sphi 0, %s245
    $region4: #{ef_recvae_forward.1} parent=1 // loop_header_branch
      %20 = sbr.rel (%p18) target = $region8
    $region5: #{ef_recvae_forward.1} parent=1 // loop_body
      %s22 = ssub.s32 %s17, 1
      %s23 = ssub.s32 %s17, 2
      %s24 = sadd.s32 %s17, 1
      %p25 = scmp.lt.s32.totalorder %s17, 0
      %s26 = scalar_select %p25, %s17, 0
      %p27 = scmp.lt.s32.totalorder %s24, 0
      %s28 = scalar_select %p27, %s24, 0
      %s29 = ssub.s32 %s26, %s28
      %p30 = scmp.eq.s32.totalorder %s29, 0
      %s32 = sadd.s32 %s31, 1
      %s33 = scalar_select %p30, %s31, %s32
      %p36 = pneg %p30
      %p37 = scmp.eq.s32.totalorder %s17, 1
      %p38 = por %p36, %p37
      %p39 = scmp.ne.s32.totalorder %s31, %s34
      %p40 = scmp.eq.s32.totalorder %s17, 0
      %p41 = por %p39, %p40
      %p42 = scmp.ne.s32.totalorder %s31, %s34
      %p43 = scmp.eq.s32.totalorder %s22, 1
      %p44 = por %p42, %p43
      %p45 = scmp.ne.s32.totalorder %s34, %s35
      %p46 = scmp.eq.s32.totalorder %s22, 0
      %p47 = por %p45, %p46
      %p48 = scmp.ne.s32.totalorder %s34, %s35
      %p49 = scmp.eq.s32.totalorder %s23, 1
      %p50 = por %p48, %p49
      %p52 = scmp.ne.s32.totalorder %s35, %s51
      %p53 = scmp.eq.s32.totalorder %s23, 0
      %p54 = por %p52, %p53
      %p55 = scmp.lt.s32.totalorder %s17, 0
      %s56 = scalar_select %p55, %s17, 0
      %p57 = scmp.lt.s32.totalorder %s24, 0
      %s58 = scalar_select %p57, %s24, 0
      %s59 = ssub.s32 %s56, %s58
      %p60 = scmp.eq.s32.totalorder %s59, 0
      %s62 = sadd.s32 %s61, 1
      %s63 = scalar_select %p60, %s61, %s62
      %p66 = pneg %p60
      %p67 = scmp.eq.s32.totalorder %s17, 1
      %p68 = por %p66, %p67
      %p69 = scmp.ne.s32.totalorder %s61, %s64
      %p70 = scmp.eq.s32.totalorder %s17, 0
      %p71 = por %p69, %p70
      %p72 = scmp.ne.s32.totalorder %s61, %s64
      %p73 = scmp.eq.s32.totalorder %s22, 1
      %p74 = por %p72, %p73
      %p75 = scmp.ne.s32.totalorder %s64, %s65
      %p76 = scmp.eq.s32.totalorder %s22, 0
      %p77 = por %p75, %p76
      %p78 = scmp.ne.s32.totalorder %s64, %s65
      %p79 = scmp.eq.s32.totalorder %s23, 1
      %p80 = por %p78, %p79
      %p82 = scmp.ne.s32.totalorder %s65, %s81
      %p83 = scmp.eq.s32.totalorder %s23, 0
      %p84 = por %p82, %p83
      %s86 = sadd.s32 %s85, 1
      %p89 = scmp.eq.s32.totalorder %s17, 1
      %p90 = scmp.ne.s32.totalorder %s85, %s87
      %p91 = scmp.eq.s32.totalorder %s17, 0
      %p92 = por %p90, %p91
      %p93 = scmp.ne.s32.totalorder %s85, %s87
      %p94 = scmp.eq.s32.totalorder %s22, 1
      %p95 = por %p93, %p94
      %p96 = scmp.ne.s32.totalorder %s87, %s88
      %p97 = scmp.eq.s32.totalorder %s22, 0
      %p98 = por %p96, %p97
      %p99 = scmp.ne.s32.totalorder %s87, %s88
      %p100 = scmp.eq.s32.totalorder %s23, 1
      %p101 = por %p99, %p100
      %p103 = scmp.ne.s32.totalorder %s88, %s102
      %p104 = scmp.eq.s32.totalorder %s23, 0
      %p105 = por %p103, %p104
      %s107 = sadd.s32 %s106, 1
      %p110 = scmp.eq.s32.totalorder %s17, 1
      %p111 = scmp.ne.s32.totalorder %s106, %s108
      %p112 = scmp.eq.s32.totalorder %s17, 0
      %p113 = por %p111, %p112
      %p114 = scmp.ne.s32.totalorder %s106, %s108
      %p115 = scmp.eq.s32.totalorder %s22, 1
      %p116 = por %p114, %p115
      %p117 = scmp.ne.s32.totalorder %s108, %s109
      %p118 = scmp.eq.s32.totalorder %s22, 0
      %p119 = por %p117, %p118
      %p120 = scmp.ne.s32.totalorder %s108, %s109
      %p121 = scmp.eq.s32.totalorder %s23, 1
      %p122 = por %p120, %p121
      %p124 = scmp.ne.s32.totalorder %s109, %s123
      %p125 = scmp.eq.s32.totalorder %s23, 0
      %p126 = por %p124, %p125
      %s128 = sadd.s32 %s127, 1
      %p131 = scmp.eq.s32.totalorder %s17, 1
      %p132 = scmp.ne.s32.totalorder %s127, %s129
      %p133 = scmp.eq.s32.totalorder %s17, 0
      %p134 = por %p132, %p133
      %p135 = scmp.ne.s32.totalorder %s127, %s129
      %p136 = scmp.eq.s32.totalorder %s22, 1
      %p137 = por %p135, %p136
      %p138 = scmp.ne.s32.totalorder %s129, %s130
      %p139 = scmp.eq.s32.totalorder %s22, 0
      %p140 = por %p138, %p139
      %p141 = scmp.ne.s32.totalorder %s129, %s130
      %p142 = scmp.eq.s32.totalorder %s23, 1
      %p143 = por %p141, %p142
      %p145 = scmp.ne.s32.totalorder %s130, %s144
      %p146 = scmp.eq.s32.totalorder %s23, 0
      %p147 = por %p145, %p146
      %s149 = sadd.s32 %s148, 1
      %p152 = scmp.eq.s32.totalorder %s17, 1
      %p153 = scmp.ne.s32.totalorder %s148, %s150
      %p154 = scmp.eq.s32.totalorder %s17, 0
      %p155 = por %p153, %p154
      %p156 = scmp.ne.s32.totalorder %s148, %s150
      %p157 = scmp.eq.s32.totalorder %s22, 1
      %p158 = por %p156, %p157
      %p159 = scmp.ne.s32.totalorder %s150, %s151
      %p160 = scmp.eq.s32.totalorder %s22, 0
      %p161 = por %p159, %p160
      %p162 = scmp.ne.s32.totalorder %s150, %s151
      %p163 = scmp.eq.s32.totalorder %s23, 1
      %p164 = por %p162, %p163
      %p166 = scmp.ne.s32.totalorder %s151, %s165
      %p167 = scmp.eq.s32.totalorder %s23, 0
      %p168 = por %p166, %p167
      %s169 = ssub.s32 %s17, 1
      %p170 = scmp.gt.s32.totalorder %s169, 0
      %s171 = scalar_select %p170, %s169, 0
      %s172 = ssub.s32 %s24, 1
      %p173 = scmp.gt.s32.totalorder %s172, 0
      %s174 = scalar_select %p173, %s172, 0
      %s175 = ssub.s32 %s171, %s174
      %p176 = scmp.eq.s32.totalorder %s175, 0
      %s178 = sadd.s32 %s177, 1
      %s179 = scalar_select %p176, %s177, %s178
      %p182 = pneg %p176
      %p183 = scmp.eq.s32.totalorder %s17, 1
      %p184 = por %p182, %p183
      %p185 = scmp.ne.s32.totalorder %s177, %s180
      %p186 = scmp.eq.s32.totalorder %s17, 0
      %p187 = por %p185, %p186
      %p188 = scmp.ne.s32.totalorder %s177, %s180
      %p189 = scmp.eq.s32.totalorder %s22, 1
      %p190 = por %p188, %p189
      %p191 = scmp.ne.s32.totalorder %s180, %s181
      %p192 = scmp.eq.s32.totalorder %s22, 0
      %p193 = por %p191, %p192
      %p194 = scmp.ne.s32.totalorder %s180, %s181
      %p195 = scmp.eq.s32.totalorder %s23, 1
      %p196 = por %p194, %p195
      %p198 = scmp.ne.s32.totalorder %s181, %s197
      %p199 = scmp.eq.s32.totalorder %s23, 0
      %p200 = por %p198, %p199
      %s201 = ssub.s32 %s17, 1
      %p202 = scmp.gt.s32.totalorder %s201, 0
      %s203 = scalar_select %p202, %s201, 0
      %s204 = ssub.s32 %s24, 1
      %p205 = scmp.gt.s32.totalorder %s204, 0
      %s206 = scalar_select %p205, %s204, 0
      %s207 = ssub.s32 %s203, %s206
      %p208 = scmp.eq.s32.totalorder %s207, 0
      %s210 = sadd.s32 %s209, 1
      %s211 = scalar_select %p208, %s209, %s210
      %p214 = pneg %p208
      %p215 = scmp.eq.s32.totalorder %s17, 1
      %p216 = por %p214, %p215
      %p217 = scmp.ne.s32.totalorder %s209, %s212
      %p218 = scmp.eq.s32.totalorder %s17, 0
      %p219 = por %p217, %p218
      %p220 = scmp.ne.s32.totalorder %s209, %s212
      %p221 = scmp.eq.s32.totalorder %s22, 1
      %p222 = por %p220, %p221
      %p223 = scmp.ne.s32.totalorder %s212, %s213
      %p224 = scmp.eq.s32.totalorder %s22, 0
      %p225 = por %p223, %p224
      %p226 = scmp.ne.s32.totalorder %s212, %s213
      %p227 = scmp.eq.s32.totalorder %s23, 1
      %p228 = por %p226, %p227
      %p230 = scmp.ne.s32.totalorder %s213, %s229
      %p231 = scmp.eq.s32.totalorder %s23, 0
      %p232 = por %p230, %p231
      %s233 = ssub.s32 %s17, 1
      %p234 = scmp.gt.s32.totalorder %s233, 0
      %s235 = scalar_select %p234, %s233, 0
      %s236 = ssub.s32 %s24, 1
      %p237 = scmp.gt.s32.totalorder %s236, 0
      %s238 = scalar_select %p237, %s236, 0
      %s239 = ssub.s32 %s235, %s238
      %p240 = scmp.eq.s32.totalorder %s239, 0
      %s242 = sadd.s32 %s241, 1
      %s243 = scalar_select %p240, %s241, %s242
      %p246 = pneg %p240
      %p247 = scmp.eq.s32.totalorder %s17, 1
      %p248 = por %p246, %p247
      %p249 = scmp.ne.s32.totalorder %s241, %s244
      %p250 = scmp.eq.s32.totalorder %s17, 0
      %p251 = por %p249, %p250
      %p252 = scmp.ne.s32.totalorder %s241, %s244
      %p253 = scmp.eq.s32.totalorder %s22, 1
      %p254 = por %p252, %p253
      %p255 = scmp.ne.s32.totalorder %s244, %s245
      %p256 = scmp.eq.s32.totalorder %s22, 0
      %p257 = por %p255, %p256
      %p258 = scmp.ne.s32.totalorder %s244, %s245
      %p259 = scmp.eq.s32.totalorder %s23, 1
      %p260 = por %p258, %p259
      %p262 = scmp.ne.s32.totalorder %s245, %s261
      %p263 = scmp.eq.s32.totalorder %s23, 0
      %p264 = por %p262, %p263
      %p265 = scmp.le.s32.totalorder 1, %s17
      %p266 = scmp.lt.s32.totalorder %s17, 3
      %p267 = pnand %p265, %p266
      %p268 = pneg %p267
      // Predicated region
      $region9: #{ef_recvae_forward.1} parent=5 // pred_check
        _
      $region10: #{ef_recvae_forward.1} parent=5 // pred_check_branch
        %270 = sbr.rel (%p267) target = $region12
      $region11: #{ef_recvae_forward.1} parent=5 // pred_region
        %s271 = ssub.s32 %s17, 1
        // Predicated region
        $region13: #{ef_recvae_forward.1} parent=11 // pred_check
          %p272 = pneg %p98
        $region14: #{ef_recvae_forward.1} parent=11 // pred_check_branch
          %274 = sbr.rel (%p272) target = $region16
        $region15: #{ef_recvae_forward.1} parent=11 // pred_region
          _
        $region16: #{ef_recvae_forward.1} parent=11 // pred_fallthru
          _
        // Predicated region
        $region17: #{ef_recvae_forward.1} parent=11 // pred_check
          %p275 = pneg %p119
        $region18: #{ef_recvae_forward.1} parent=11 // pred_check_branch
          %277 = sbr.rel (%p275) target = $region20
        $region19: #{ef_recvae_forward.1} parent=11 // pred_region
          _
        $region20: #{ef_recvae_forward.1} parent=11 // pred_fallthru
          _
        // Predicated region
        $region21: #{ef_recvae_forward.1} parent=11 // pred_check
          %p278 = pneg %p140
        $region22: #{ef_recvae_forward.1} parent=11 // pred_check_branch
          %280 = sbr.rel (%p278) target = $region24
        $region23: #{ef_recvae_forward.1} parent=11 // pred_region
          _
        $region24: #{ef_recvae_forward.1} parent=11 // pred_fallthru
          _
        // Predicated region
        $region25: #{ef_recvae_forward.1} parent=11 // pred_check
          %p281 = pneg %p161
        $region26: #{ef_recvae_forward.1} parent=11 // pred_check_branch
          %283 = sbr.rel (%p281) target = $region28
        $region27: #{ef_recvae_forward.1} parent=11 // pred_region
          _
        $region28: #{ef_recvae_forward.1} parent=11 // pred_fallthru
          _
      $region12: #{ef_recvae_forward.1} parent=5 // pred_fallthru
        _
      %p284 = scmp.lt.s32.totalorder %s17, 2
      // Predicated region
      $region29: #{ef_recvae_forward.1} parent=5 // pred_check
        %p285 = pneg %p284
      $region30: #{ef_recvae_forward.1} parent=5 // pred_check_branch
        %287 = sbr.rel (%p285) target = $region32
      $region31: #{ef_recvae_forward.1} parent=5 // pred_region
        // Predicated region
        $region33: #{ef_recvae_forward.1} parent=31 // pred_check
          %p288 = pneg %p41
        $region34: #{ef_recvae_forward.1} parent=31 // pred_check_branch
          %290 = sbr.rel (%p288) target = $region36
        $region35: #{ef_recvae_forward.1} parent=31 // pred_region
          %p291 = scmp.lt.s32.totalorder %s17, 0
          %s292 = scalar_select %p291, %s17, 0
          %s293 = smul.u32 4, %s292
          %p294 = scmp.lt.s32.totalorder %s293, 3
          %s295 = scalar_select %p294, %s293, 3
          %s296 = smul.addr %s295, 8
          %s297 = scalar_lea.vmem %s0, %s296
          %p298 = scmp.lt.s32.totalorder %s17, 0
          %s299 = scalar_select %p298, %s17, 0
          %s300 = smul.u32 4, %s299
        $region36: #{ef_recvae_forward.1} parent=31 // pred_fallthru
          _
        // Predicated region
        $region37: #{ef_recvae_forward.1} parent=31 // pred_check
          %p301 = pneg %p71
        $region38: #{ef_recvae_forward.1} parent=31 // pred_check_branch
          %303 = sbr.rel (%p301) target = $region40
        $region39: #{ef_recvae_forward.1} parent=31 // pred_region
          %p304 = scmp.lt.s32.totalorder %s17, 0
          %s305 = scalar_select %p304, %s17, 0
          %s306 = smul.u32 64, %s305
          %p307 = scmp.lt.s32.totalorder %s306, 63
          %s308 = scalar_select %p307, %s306, 63
          %s309 = smul.addr %s308, 8
          %s310 = scalar_lea.vmem %s1, %s309
          %p311 = scmp.lt.s32.totalorder %s17, 0
          %s312 = scalar_select %p311, %s17, 0
          %s313 = smul.u32 64, %s312
        $region40: #{ef_recvae_forward.1} parent=31 // pred_fallthru
          _
        // Predicated region
        $region41: #{ef_recvae_forward.1} parent=31 // pred_check
          %p314 = pneg %p187
        $region42: #{ef_recvae_forward.1} parent=31 // pred_check_branch
          %316 = sbr.rel (%p314) target = $region44
        $region43: #{ef_recvae_forward.1} parent=31 // pred_region
          %s317 = ssub.s32 %s17, 1
          %p318 = scmp.gt.s32.totalorder %s317, 0
          %s319 = scalar_select %p318, %s317, 0
          %s320 = smul.u32 64, %s319
          %p321 = scmp.lt.s32.totalorder %s320, 63
          %s322 = scalar_select %p321, %s320, 63
          %s323 = smul.addr %s322, 8
          %s324 = scalar_lea.vmem %s6, %s323
          %s325 = ssub.s32 %s17, 1
          %p326 = scmp.gt.s32.totalorder %s325, 0
          %s327 = scalar_select %p326, %s325, 0
          %s328 = smul.u32 64, %s327
        $region44: #{ef_recvae_forward.1} parent=31 // pred_fallthru
          _
        // Predicated region
        $region45: #{ef_recvae_forward.1} parent=31 // pred_check
          %p329 = pneg %p219
        $region46: #{ef_recvae_forward.1} parent=31 // pred_check_branch
          %331 = sbr.rel (%p329) target = $region48
        $region47: #{ef_recvae_forward.1} parent=31 // pred_region
          %s332 = ssub.s32 %s17, 1
          %p333 = scmp.gt.s32.totalorder %s332, 0
          %s334 = scalar_select %p333, %s332, 0
          %s335 = smul.u32 4, %s334
          %p336 = scmp.lt.s32.totalorder %s335, 3
          %s337 = scalar_select %p336, %s335, 3
          %s338 = scalar_lea.vmem %s7, %s337
          %s339 = ssub.s32 %s17, 1
          %p340 = scmp.gt.s32.totalorder %s339, 0
          %s341 = scalar_select %p340, %s339, 0
          %s342 = smul.u32 4, %s341
        $region48: #{ef_recvae_forward.1} parent=31 // pred_fallthru
          _
      $region32: #{ef_recvae_forward.1} parent=5 // pred_fallthru
        _
      %p343 = scmp.le.s32.totalorder 1, %s17
      %p344 = scmp.lt.s32.totalorder %s17, 3
      %p345 = pnand %p343, %p344
      %p346 = pneg %p345
      // Predicated region
      $region49: #{ef_recvae_forward.1} parent=5 // pred_check
        _
      $region50: #{ef_recvae_forward.1} parent=5 // pred_check_branch
        %348 = sbr.rel (%p345) target = $region52
      $region51: #{ef_recvae_forward.1} parent=5 // pred_region
        %s349 = ssub.s32 %s17, 1
        %p350 = scmp.lt.s32.totalorder %s22, 0
        %s351 = scalar_select %p350, %s22, 0
        %s352 = smul.u32 4, %s351
        %p353 = scmp.lt.s32.totalorder %s352, 3
        %s354 = scalar_select %p353, %s352, 3
        %s355 = smul.addr %s354, 8
        %s356 = scalar_lea.vmem %s0, %s355
        %p357 = pneg %p47
        %p358 = pneg %p44
        %p359 = scmp.lt.s32.totalorder %s22, 0
        %s360 = scalar_select %p359, %s22, 0
        %s361 = smul.u32 64, %s360
        %p362 = scmp.lt.s32.totalorder %s361, 63
        %s363 = scalar_select %p362, %s361, 63
        %s364 = smul.addr %s363, 8
        %s365 = scalar_lea.vmem %s1, %s364
        %p366 = pneg %p77
        %p367 = pneg %p74
        %p368 = pneg %p98
        %p369 = pneg %p95
        %p370 = pneg %p119
        %p371 = pneg %p116
        %p372 = pneg %p140
        %p373 = pneg %p137
        %p374 = pneg %p161
        %p375 = pneg %p158
        %s376 = ssub.s32 %s22, 1
        %p377 = scmp.gt.s32.totalorder %s376, 0
        %s378 = scalar_select %p377, %s376, 0
        %s379 = smul.u32 64, %s378
        %p380 = scmp.lt.s32.totalorder %s379, 63
        %s381 = scalar_select %p380, %s379, 63
        %s382 = smul.addr %s381, 8
        %s383 = scalar_lea.vmem %s6, %s382
        %p384 = pneg %p193
        %p385 = pneg %p190
        %s386 = ssub.s32 %s22, 1
        %p387 = scmp.gt.s32.totalorder %s386, 0
        %s388 = scalar_select %p387, %s386, 0
        %s389 = smul.u32 4, %s388
        %p390 = scmp.lt.s32.totalorder %s389, 3
        %s391 = scalar_select %p390, %s389, 3
        %s392 = scalar_lea.vmem %s7, %s391
        %p393 = pneg %p225
        %p394 = pneg %p222
        %p395 = pneg %p257
        %p396 = pneg %p254
        %s397 = sand.u32 %s244, 1
        %s398 = scalar_lea.sflag [#allocation6], %s397
        %s399 = sand.u32 %s244, 1
        %s400 = smul.addr %s399, 32
        %s401 = scalar_lea.vmem [#allocation5], %s400
        %p402 = scmp.lt.s32.totalorder %s22, 0
        %s403 = scalar_select %p402, %s22, 0
        %s404 = smul.u32 4, %s403
        %p405 = scmp.lt.s32.totalorder %s404, 3
        %s406 = scalar_select %p405, %s404, 3
        %s407 = smul.addr %s406, 8
        %s408 = scalar_lea.vmem %s0, %s407
        %p409 = scmp.lt.s32.totalorder %s22, 0
        %s410 = scalar_select %p409, %s22, 0
        %s411 = smul.u32 4, %s410
        %p412 = scmp.lt.s32.totalorder %s22, 0
        %s413 = scalar_select %p412, %s22, 0
        %s414 = smul.u32 64, %s413
        %p415 = scmp.lt.s32.totalorder %s414, 63
        %s416 = scalar_select %p415, %s414, 63
        %s417 = smul.addr %s416, 8
        %s418 = scalar_lea.vmem %s1, %s417
        %p419 = scmp.lt.s32.totalorder %s22, 0
        %s420 = scalar_select %p419, %s22, 0
        %s421 = smul.u32 64, %s420
        %s422 = ssub.s32 %s22, 1
        %p423 = scmp.gt.s32.totalorder %s422, 0
        %s424 = scalar_select %p423, %s422, 0
        %s425 = smul.u32 64, %s424
        %p426 = scmp.lt.s32.totalorder %s425, 63
        %s427 = scalar_select %p426, %s425, 63
        %s428 = smul.addr %s427, 8
        %s429 = scalar_lea.vmem %s6, %s428
        %s430 = ssub.s32 %s22, 1
        %p431 = scmp.gt.s32.totalorder %s430, 0
        %s432 = scalar_select %p431, %s430, 0
        %s433 = smul.u32 64, %s432
        %s434 = ssub.s32 %s22, 1
        %p435 = scmp.gt.s32.totalorder %s434, 0
        %s436 = scalar_select %p435, %s434, 0
        %s437 = smul.u32 4, %s436
        %p438 = scmp.lt.s32.totalorder %s437, 3
        %s439 = scalar_select %p438, %s437, 3
        %s440 = scalar_lea.vmem %s7, %s439
        %s441 = ssub.s32 %s22, 1
        %p442 = scmp.gt.s32.totalorder %s441, 0
        %s443 = scalar_select %p442, %s441, 0
        %s444 = smul.u32 4, %s443
        %s445 = ssub.s32 %s22, 1
        %p446 = scmp.gt.s32.totalorder %s445, 0
        %s447 = scalar_select %p446, %s445, 0
        %s448 = smul.u32 4, %s447
        %p449 = scmp.eq.s32.totalorder %s22, 0
        // Predicated region
        $region53: #{ef_recvae_forward.1} parent=51 // pred_check
          %p450 = pneg %p449
        $region54: #{ef_recvae_forward.1} parent=51 // pred_check_branch
          %452 = sbr.rel (%p450) target = $region56
        $region55: #{ef_recvae_forward.1} parent=51 // pred_region
          %vm453 = vcmask 523264
          %454 = vst.msk [vmem:[#allocation2] sm:$0xff] %vm453, 0.0
          %vm455 = vcmask 7168
          %456 = vst.msk [vmem:[#allocation3] sm:$0xff] %vm455, 0.0
        $region56: #{ef_recvae_forward.1} parent=51 // pred_fallthru
          _
        %p457 = scmp.lt.s32.totalorder %s22, 1
        // Predicated region
        $region57: #{ef_recvae_forward.1} parent=51 // pred_check
          %p458 = pneg %p457
        $region58: #{ef_recvae_forward.1} parent=51 // pred_check_branch
          %460 = sbr.rel (%p458) target = $region60
        $region59: #{ef_recvae_forward.1} parent=51 // pred_region
          %v461 = vld [vmem:[%s408] sm:$0xff]
          %v462 = vld [vmem:[%s408 + $0x8] sm:$0xff]
          %v463 = vld [vmem:[%s408 + $0x10] sm:$0xff]
          %v464 = vld [vmem:[%s408 + $0x18] sm:$0xff]
          %v465 = vld [vmem:[%s418] sm:$0xff]
          %v466 = vld [vmem:[%s418 + $0x8] sm:$0xff]
          %v467 = vld [vmem:[%s418 + $0x10] sm:$0xff]
          %v468 = vld [vmem:[%s418 + $0x18] sm:$0xff]
          %v469 = vld [vmem:[%s418 + $0x20] sm:$0xff]
          %v470 = vld [vmem:[%s418 + $0x28] sm:$0xff]
          %v471 = vld [vmem:[%s418 + $0x30] sm:$0xff]
          %v472 = vld [vmem:[%s418 + $0x38] sm:$0xff]
          %v473 = vld [vmem:[%s418 + $0x40] sm:$0xff]
          %v474 = vld [vmem:[%s418 + $0x48] sm:$0xff]
          %v475 = vld [vmem:[%s418 + $0x50] sm:$0xff]
          %v476 = vld [vmem:[%s418 + $0x58] sm:$0xff]
          %v477 = vld [vmem:[%s418 + $0x60] sm:$0xff]
          %v478 = vld [vmem:[%s418 + $0x68] sm:$0xff]
          %v479 = vld [vmem:[%s418 + $0x70] sm:$0xff]
          %v480 = vld [vmem:[%s418 + $0x78] sm:$0xff]
          %v481 = vld [vmem:[%s418 + $0x80] sm:$0xff]
          %v482 = vld [vmem:[%s418 + $0x88] sm:$0xff]
          %v483 = vld [vmem:[%s418 + $0x90] sm:$0xff]
          %v484 = vld [vmem:[%s418 + $0x98] sm:$0xff]
          %v485 = vld [vmem:[%s418 + $0xa0] sm:$0xff]
          %v486 = vld [vmem:[%s418 + $0xa8] sm:$0xff]
          %v487 = vld [vmem:[%s418 + $0xb0] sm:$0xff]
          %v488 = vld [vmem:[%s418 + $0xb8] sm:$0xff]
          %v489 = vld [vmem:[%s418 + $0xc0] sm:$0xff]
          %v490 = vld [vmem:[%s418 + $0xc8] sm:$0xff]
          %v491 = vld [vmem:[%s418 + $0xd0] sm:$0xff]
          %v492 = vld [vmem:[%s418 + $0xd8] sm:$0xff]
          %v493 = vld [vmem:[%s418 + $0xe0] sm:$0xff]
          %v494 = vld [vmem:[%s418 + $0xe8] sm:$0xff]
          %v495 = vld [vmem:[%s418 + $0xf0] sm:$0xff]
          %v496 = vld [vmem:[%s418 + $0xf8] sm:$0xff]
          %v497 = vld [vmem:[%s418 + $0x100] sm:$0xff]
          %v498 = vld [vmem:[%s418 + $0x108] sm:$0xff]
          %v499 = vld [vmem:[%s418 + $0x110] sm:$0xff]
          %v500 = vld [vmem:[%s418 + $0x118] sm:$0xff]
          %v501 = vld [vmem:[%s418 + $0x120] sm:$0xff]
          %v502 = vld [vmem:[%s418 + $0x128] sm:$0xff]
          %v503 = vld [vmem:[%s418 + $0x130] sm:$0xff]
          %v504 = vld [vmem:[%s418 + $0x138] sm:$0xff]
          %v505 = vld [vmem:[%s418 + $0x140] sm:$0xff]
          %v506 = vld [vmem:[%s418 + $0x148] sm:$0xff]
          %v507 = vld [vmem:[%s418 + $0x150] sm:$0xff]
          %v508 = vld [vmem:[%s418 + $0x158] sm:$0xff]
          %v509 = vld [vmem:[%s418 + $0x160] sm:$0xff]
          %v510 = vld [vmem:[%s418 + $0x168] sm:$0xff]
          %v511 = vld [vmem:[%s418 + $0x170] sm:$0xff]
          %v512 = vld [vmem:[%s418 + $0x178] sm:$0xff]
          %v513 = vld [vmem:[%s418 + $0x180] sm:$0xff]
          %v514 = vld [vmem:[%s418 + $0x188] sm:$0xff]
          %v515 = vld [vmem:[%s418 + $0x190] sm:$0xff]
          %v516 = vld [vmem:[%s418 + $0x198] sm:$0xff]
          %v517 = vld [vmem:[%s418 + $0x1a0] sm:$0xff]
          %v518 = vld [vmem:[%s418 + $0x1a8] sm:$0xff]
          %v519 = vld [vmem:[%s418 + $0x1b0] sm:$0xff]
          %v520 = vld [vmem:[%s418 + $0x1b8] sm:$0xff]
          %v521 = vld [vmem:[%s418 + $0x1c0] sm:$0xff]
          %v522 = vld [vmem:[%s418 + $0x1c8] sm:$0xff]
          %v523 = vld [vmem:[%s418 + $0x1d0] sm:$0xff]
          %v524 = vld [vmem:[%s418 + $0x1d8] sm:$0xff]
          %v525 = vld [vmem:[%s418 + $0x1e0] sm:$0xff]
          %v526 = vld [vmem:[%s418 + $0x1e8] sm:$0xff]
          %v527 = vld [vmem:[%s418 + $0x1f0] sm:$0xff]
          %v528 = vld [vmem:[%s418 + $0x1f8] sm:$0xff]
          %v529 = vld [vmem:[#allocation2] sm:$0xff]
          %530 = vmatprep.subr.mxu0 0.0
          %531 = vmatpush1.msra.mxu0 %v480
          %532 = vmatprep.subr.mxu0 0.0
          %533 = vmatpush1.msra.mxu0 %v479
          %534 = vmatprep.subr.mxu0 0.0
          %535 = vmatpush1.msra.mxu0 %v478
          %536 = vmatprep.subr.mxu0 0.0
          %537 = vmatpush1.msra.mxu0 %v477
          %538 = vmatprep.subr.mxu0 0.0
          %539 = vmatpush1.msra.mxu0 %v476
          %540 = vmatprep.subr.mxu0 0.0
          %541 = vmatpush1.msra.mxu0 %v475
          %542 = vmatprep.subr.mxu0 0.0
          %543 = vmatpush1.msra.mxu0 %v474
          %544 = vmatprep.subr.mxu0 0.0
          %545 = vmatpush1.msra.mxu0 %v473
          %546 = vmatprep.subr.mxu0 0.0
          %547 = vmatpush1.msra.mxu0 %v472
          %548 = vmatprep.subr.mxu0 0.0
          %549 = vmatpush1.msra.mxu0 %v471
          %550 = vmatprep.subr.mxu0 0.0
          %551 = vmatpush1.msra.mxu0 %v470
          %552 = vmatprep.subr.mxu0 0.0
          %553 = vmatpush1.msra.mxu0 %v469
          %554 = vmatprep.subr.mxu0 0.0
          %555 = vmatpush1.msra.mxu0 %v468
          %556 = vmatprep.subr.mxu0 0.0
          %557 = vmatpush1.msra.mxu0 %v467
          %558 = vmatprep.subr.mxu0 0.0
          %559 = vmatpush1.msra.mxu0 %v466
          %560 = vmatprep.subr.mxu0 0.0
          %561 = vmatpush1.msra.mxu0 %v465
          %562 = vmatprep.subr.mxu0 0.0
          %563 = vmatpush2.msra.mxu0 %v496
          %564 = vmatprep.subr.mxu0 0.0
          %565 = vmatpush2.msra.mxu0 %v495
          %566 = vmatprep.subr.mxu0 0.0
          %567 = vmatpush2.msra.mxu0 %v494
          %568 = vmatprep.subr.mxu0 0.0
          %569 = vmatpush2.msra.mxu0 %v493
          %570 = vmatprep.subr.mxu0 0.0
          %571 = vmatpush2.msra.mxu0 %v492
          %572 = vmatprep.subr.mxu0 0.0
          %573 = vmatpush2.msra.mxu0 %v491
          %574 = vmatprep.subr.mxu0 0.0
          %575 = vmatpush2.msra.mxu0 %v490
          %576 = vmatprep.subr.mxu0 0.0
          %577 = vmatpush2.msra.mxu0 %v489
          %578 = vmatprep.subr.mxu0 0.0
          %579 = vmatpush2.msra.mxu0 %v488
          %580 = vmatprep.subr.mxu0 0.0
          %581 = vmatpush2.msra.mxu0 %v487
          %582 = vmatprep.subr.mxu0 0.0
          %583 = vmatpush2.msra.mxu0 %v486
          %584 = vmatprep.subr.mxu0 0.0
          %585 = vmatpush2.msra.mxu0 %v485
          %586 = vmatprep.subr.mxu0 0.0
          %587 = vmatpush2.msra.mxu0 %v484
          %588 = vmatprep.subr.mxu0 0.0
          %589 = vmatpush2.msra.mxu0 %v483
          %590 = vmatprep.subr.mxu0 0.0
          %591 = vmatpush2.msra.mxu0 %v482
          %592 = vmatprep.subr.mxu0 0.0
          %593 = vmatpush2.msra.mxu0 %v481
          %594 = vmatprep.mubr.f32.mxu0 %v462
          %595 = vmatmul.mubr.f32.gmra.mxu0 %v461
          %v596 = vpop.f32.mrf.mxu0
          %v597 = vadd.f32 0.0, %v596
          %v598 = vpop.f32.mrf.mxu0
          %599 = vdwg.mxu0
          %600 = vmatprep.subr.mxu0 0.0
          %601 = vmatpush1.msra.mxu0 %v512
          %602 = vmatprep.subr.mxu0 0.0
          %603 = vmatpush1.msra.mxu0 %v511
          %604 = vmatprep.subr.mxu0 0.0
          %605 = vmatpush1.msra.mxu0 %v510
          %606 = vmatprep.subr.mxu0 0.0
          %607 = vmatpush1.msra.mxu0 %v509
          %608 = vmatprep.subr.mxu0 0.0
          %609 = vmatpush1.msra.mxu0 %v508
          %610 = vmatprep.subr.mxu0 0.0
          %611 = vmatpush1.msra.mxu0 %v507
          %612 = vmatprep.subr.mxu0 0.0
          %613 = vmatpush1.msra.mxu0 %v506
          %614 = vmatprep.subr.mxu0 0.0
          %615 = vmatpush1.msra.mxu0 %v505
          %616 = vmatprep.subr.mxu0 0.0
          %617 = vmatpush1.msra.mxu0 %v504
          %618 = vmatprep.subr.mxu0 0.0
          %619 = vmatpush1.msra.mxu0 %v503
          %620 = vmatprep.subr.mxu0 0.0
          %621 = vmatpush1.msra.mxu0 %v502
          %622 = vmatprep.subr.mxu0 0.0
          %623 = vmatpush1.msra.mxu0 %v501
          %624 = vmatprep.subr.mxu0 0.0
          %625 = vmatpush1.msra.mxu0 %v500
          %626 = vmatprep.subr.mxu0 0.0
          %627 = vmatpush1.msra.mxu0 %v499
          %628 = vmatprep.subr.mxu0 0.0
          %629 = vmatpush1.msra.mxu0 %v498
          %630 = vmatprep.subr.mxu0 0.0
          %631 = vmatpush1.msra.mxu0 %v497
          %632 = vmatprep.subr.mxu0 0.0
          %633 = vmatpush2.msra.mxu0 %v528
          %634 = vmatprep.subr.mxu0 0.0
          %635 = vmatpush2.msra.mxu0 %v527
          %636 = vmatprep.subr.mxu0 0.0
          %637 = vmatpush2.msra.mxu0 %v526
          %638 = vmatprep.subr.mxu0 0.0
          %639 = vmatpush2.msra.mxu0 %v525
          %640 = vmatprep.subr.mxu0 0.0
          %641 = vmatpush2.msra.mxu0 %v524
          %642 = vmatprep.subr.mxu0 0.0
          %643 = vmatpush2.msra.mxu0 %v523
          %644 = vmatprep.subr.mxu0 0.0
          %645 = vmatpush2.msra.mxu0 %v522
          %646 = vmatprep.subr.mxu0 0.0
          %647 = vmatpush2.msra.mxu0 %v521
          %648 = vmatprep.subr.mxu0 0.0
          %649 = vmatpush2.msra.mxu0 %v520
          %650 = vmatprep.subr.mxu0 0.0
          %651 = vmatpush2.msra.mxu0 %v519
          %652 = vmatprep.subr.mxu0 0.0
          %653 = vmatpush2.msra.mxu0 %v518
          %654 = vmatprep.subr.mxu0 0.0
          %655 = vmatpush2.msra.mxu0 %v517
          %656 = vmatprep.subr.mxu0 0.0
          %657 = vmatpush2.msra.mxu0 %v516
          %658 = vmatprep.subr.mxu0 0.0
          %659 = vmatpush2.msra.mxu0 %v515
          %660 = vmatprep.subr.mxu0 0.0
          %661 = vmatpush2.msra.mxu0 %v514
          %662 = vmatprep.subr.mxu0 0.0
          %663 = vmatpush2.msra.mxu0 %v513
          %664 = vmatprep.mubr.f32.mxu0 %v464
          %665 = vmatmul.mubr.f32.gmra.mxu0 %v463
          %v666 = vpop.f32.mrf.mxu0
          %v667 = vadd.f32 %v597, %v666
          %v668 = vpop.f32.mrf.mxu0
          %669 = vdwg.mxu0
          %v670 = vadd.f32 %v529, %v667
          %vm671 = vcmask 523264
          %672 = vst.msk [vmem:[#allocation2] sm:$0xff] %vm671, %v670
          %v673 = vld [vmem:[#allocation3] sm:$0xff]
          %v674 = vmul.f32 %v461, %v461
          %v675 = vmul.f32 %v462, %v462
          %v676 = vmul.f32 %v463, %v463
          %v677 = vmul.f32 %v464, %v464
          %v678 = vadd.f32 %v674, %v675
          %v679 = vadd.f32 %v678, %v676
          %v680 = vadd.f32 %v679, %v677
          %681 = vadd.xlane.f32.xlu0 %v680
          %v682 = vpop.xlane.xlu0 %681
          %v683 = vadd.f32 %v673, %v682
          %vm684 = vcmask 7168
          %685 = vst.msk [vmem:[#allocation3] sm:$0xff] %vm684, %v683
        $region60: #{ef_recvae_forward.1} parent=51 // pred_fallthru
          _
        // Predicated region
        $region61: #{ef_recvae_forward.1} parent=51 // pred_check
          %p686 = pneg %p449
        $region62: #{ef_recvae_forward.1} parent=51 // pred_check_branch
          %688 = sbr.rel (%p686) target = $region64
        $region63: #{ef_recvae_forward.1} parent=51 // pred_region
          %v689 = vld [vmem:[#allocation3] sm:$0xff]
          %v690 = vrsqrt.pop %v689
          %v691 = vmul.f32 %v689, %v690
          %vm692 = vcmp.eq.f32.partialorder %v689, inf
          %v693 = vsel %vm692, %v689, %v691
          %vm694 = vcmp.eq.f32.partialorder %v689, 0.0
          %v695 = vand.u32 %v689, 2147483648
          %v696 = vsel %vm694, %v695, %v693
          %v697 = vmax.f32 %v696, 1e-12
          %v698 = vrcp.pop %v697
          %v699 = vmul.f32 1.0, %v698
          %v700 = vld [vmem:[#allocation2] sm:$0xff]
          %702 = vset.pattern.permute.xlu0 0
          %703 = vperm.xlu0 %702, %v699
          %v704 = vpop.permute.xlu0 %703
          %v706 = vmul.f32 %v700, %v704
          %v707 = vld [vmem:[%s2] sm:$0x1]
          %v708 = vlaneseq
          %v709 = vshrl.u32 %v708, 7
          %v710 = vsub.s32 0, %v709
          %v711 = vrot.slane %v707, %v710
          %v712 = vadd.f32 %v706, %v711
          %v713 = vxor.u32 %v712, 2147483648
          %v714 = vmul.f32 %v713, 1.442695
          %v715 = vpow.pop %v714
          %v716 = vadd.f32 %v715, 1.0
          %v717 = vrcp.pop %v716
          %v718 = vmul.f32 1.0, %v717
          %v719 = vmul.f32 %v712, %v718
          %v720 = vld [vmem:[%s2 + $0x1] sm:$0x1]
          %v721 = vld [vmem:[%s2 + $0x2] sm:$0x1]
          %vm722 = vcmask 523264
          %v723 = vsel %vm722, %v719, 0.0
          %724 = vadd.xlane.f32.xlu0 %v723
          %v725 = vpop.xlane.xlu0 %724
          %v726 = vrcp.pop 64.0
          %v727 = vmul.f32 %v725, %v726
          %v728 = vsub.f32 %v719, %v727
          %v729 = vmul.f32 %v728, %v728
          %v730 = vsel %vm722, %v729, 0.0
          %731 = vadd.xlane.f32.xlu0 %v730
          %v732 = vpop.xlane.xlu0 %731
          %v733 = vmul.f32 %v732, %v726
          %v734 = vadd.f32 %v733, 0.1
          %v735 = vrsqrt.pop %v734
          %v736 = vmul.f32 %v734, %v735
          %vm737 = vcmp.eq.f32.partialorder %v734, inf
          %v738 = vsel %vm737, %v734, %v736
          %vm739 = vcmp.eq.f32.partialorder %v734, 0.0
          %v740 = vand.u32 %v734, 2147483648
          %v741 = vsel %vm739, %v740, %v738
          %v742 = vrcp.pop %v741
          %v743 = vmul.f32 %v728, %v742
          %v744 = vlaneseq
          %v745 = vshrl.u32 %v744, 7
          %v746 = vsub.s32 0, %v745
          %v747 = vrot.slane %v720, %v746
          %v748 = vmul.f32 %v743, %v747
          %v749 = vlaneseq
          %v750 = vshrl.u32 %v749, 7
          %v751 = vsub.s32 0, %v750
          %v752 = vrot.slane %v721, %v751
          %v753 = vadd.f32 %v748, %v752
          %v754 = vld [vmem:[%s3] sm:$0xff]
          %v755 = vld [vmem:[%s3 + $0x8] sm:$0xff]
          %v756 = vld [vmem:[%s3 + $0x10] sm:$0xff]
          %v757 = vld [vmem:[%s3 + $0x18] sm:$0xff]
          %v758 = vld [vmem:[%s3 + $0x20] sm:$0xff]
          %v759 = vld [vmem:[%s3 + $0x28] sm:$0xff]
          %v760 = vld [vmem:[%s3 + $0x30] sm:$0xff]
          %v761 = vld [vmem:[%s3 + $0x38] sm:$0xff]
          %v762 = vld [vmem:[%s2 + $0x3] sm:$0x1]
          %v763 = vlaneseq
          %v764 = vshrl.u32 %v763, 7
          %v765 = vsub.s32 0, %v764
          %v766 = vrot.slane %v762, %v765
          %v768 = vsel %vm722, %v753, 0
          %770 = vmatprep.subr.mxu0 0.0
          %771 = vmatpush1.msra.mxu0 0.0
          %772 = vmatprep.subr.mxu0 0.0
          %773 = vmatpush1.msra.mxu0 0.0
          %774 = vmatprep.subr.mxu0 0.0
          %775 = vmatpush1.msra.mxu0 0.0
          %776 = vmatprep.subr.mxu0 0.0
          %777 = vmatpush1.msra.mxu0 0.0
          %778 = vmatprep.subr.mxu0 0.0
          %779 = vmatpush1.msra.mxu0 0.0
          %780 = vmatprep.subr.mxu0 0.0
          %781 = vmatpush1.msra.mxu0 0.0
          %782 = vmatprep.subr.mxu0 0.0
          %783 = vmatpush1.msra.mxu0 0.0
          %784 = vmatprep.subr.mxu0 0.0
          %785 = vmatpush1.msra.mxu0 0.0
          %786 = vmatprep.subr.mxu0 0.0
          %787 = vmatpush1.msra.mxu0 %v761
          %788 = vmatprep.subr.mxu0 0.0
          %789 = vmatpush1.msra.mxu0 %v760
          %790 = vmatprep.subr.mxu0 0.0
          %791 = vmatpush1.msra.mxu0 %v759
          %792 = vmatprep.subr.mxu0 0.0
          %793 = vmatpush1.msra.mxu0 %v758
          %794 = vmatprep.subr.mxu0 0.0
          %795 = vmatpush1.msra.mxu0 %v757
          %796 = vmatprep.subr.mxu0 0.0
          %797 = vmatpush1.msra.mxu0 %v756
          %798 = vmatprep.subr.mxu0 0.0
          %799 = vmatpush1.msra.mxu0 %v755
          %800 = vmatprep.subr.mxu0 0.0
          %801 = vmatpush1.msra.mxu0 %v754
          %802 = vmatprep.subr.mxu0 0.0
          %803 = vmatpush2.msra.mxu0 0.0
          %804 = vmatprep.subr.mxu0 0.0
          %805 = vmatpush2.msra.mxu0 0.0
          %806 = vmatprep.subr.mxu0 0.0
          %807 = vmatpush2.msra.mxu0 0.0
          %808 = vmatprep.subr.mxu0 0.0
          %809 = vmatpush2.msra.mxu0 0.0
          %810 = vmatprep.subr.mxu0 0.0
          %811 = vmatpush2.msra.mxu0 0.0
          %812 = vmatprep.subr.mxu0 0.0
          %813 = vmatpush2.msra.mxu0 0.0
          %814 = vmatprep.subr.mxu0 0.0
          %815 = vmatpush2.msra.mxu0 0.0
          %816 = vmatprep.subr.mxu0 0.0
          %817 = vmatpush2.msra.mxu0 0.0
          %818 = vmatprep.subr.mxu0 0.0
          %819 = vmatpush2.msra.mxu0 0.0
          %820 = vmatprep.subr.mxu0 0.0
          %821 = vmatpush2.msra.mxu0 0.0
          %822 = vmatprep.subr.mxu0 0.0
          %823 = vmatpush2.msra.mxu0 0.0
          %824 = vmatprep.subr.mxu0 0.0
          %825 = vmatpush2.msra.mxu0 0.0
          %826 = vmatprep.subr.mxu0 0.0
          %827 = vmatpush2.msra.mxu0 0.0
          %828 = vmatprep.subr.mxu0 0.0
          %829 = vmatpush2.msra.mxu0 0.0
          %830 = vmatprep.subr.mxu0 0.0
          %831 = vmatpush2.msra.mxu0 0.0
          %832 = vmatprep.subr.mxu0 0.0
          %833 = vmatpush2.msra.mxu0 0.0
          %834 = vmatprep.mubr.f32.mxu0 0.0
          %835 = vmatmul.mubr.f32.gmra.mxu0 %v768
          %v836 = vpop.f32.mrf.mxu0
          %v837 = vadd.f32 %v766, %v836
          %v838 = vpop.f32.mrf.mxu0
          %839 = vdwg.mxu0
          %v840 = vadd.f32 %v837, %v753
          %v841 = vxor.u32 %v840, 2147483648
          %v842 = vmul.f32 %v841, 1.442695
          %v843 = vpow.pop %v842
          %v844 = vadd.f32 %v843, 1.0
          %v845 = vrcp.pop %v844
          %v846 = vmul.f32 1.0, %v845
          %v847 = vmul.f32 %v840, %v846
          %v848 = vld [vmem:[%s2 + $0x4] sm:$0x1]
          %v849 = vld [vmem:[%s2 + $0x5] sm:$0x1]
          %v850 = vsel %vm722, %v847, 0.0
          %851 = vadd.xlane.f32.xlu0 %v850
          %v852 = vpop.xlane.xlu0 %851
          %v853 = vmul.f32 %v852, %v726
          %v854 = vsub.f32 %v847, %v853
          %v855 = vmul.f32 %v854, %v854
          %v856 = vsel %vm722, %v855, 0.0
          %857 = vadd.xlane.f32.xlu0 %v856
          %v858 = vpop.xlane.xlu0 %857
          %v859 = vmul.f32 %v858, %v726
          %v860 = vadd.f32 %v859, 0.1
          %v861 = vrsqrt.pop %v860
          %v862 = vmul.f32 %v860, %v861
          %vm863 = vcmp.eq.f32.partialorder %v860, inf
          %v864 = vsel %vm863, %v860, %v862
          %vm865 = vcmp.eq.f32.partialorder %v860, 0.0
          %v866 = vand.u32 %v860, 2147483648
          %v867 = vsel %vm865, %v866, %v864
          %v868 = vrcp.pop %v867
          %v869 = vmul.f32 %v854, %v868
          %v870 = vlaneseq
          %v871 = vshrl.u32 %v870, 7
          %v872 = vsub.s32 0, %v871
          %v873 = vrot.slane %v848, %v872
          %v874 = vmul.f32 %v869, %v873
          %v875 = vlaneseq
          %v876 = vshrl.u32 %v875, 7
          %v877 = vsub.s32 0, %v876
          %v878 = vrot.slane %v849, %v877
          %v879 = vadd.f32 %v874, %v878
          %v880 = vld [vmem:[%s4] sm:$0xff]
          %v881 = vld [vmem:[%s4 + $0x8] sm:$0xff]
          %v882 = vld [vmem:[%s4 + $0x10] sm:$0xff]
          %v883 = vld [vmem:[%s4 + $0x18] sm:$0xff]
          %v884 = vld [vmem:[%s4 + $0x20] sm:$0xff]
          %v885 = vld [vmem:[%s4 + $0x28] sm:$0xff]
          %v886 = vld [vmem:[%s4 + $0x30] sm:$0xff]
          %v887 = vld [vmem:[%s4 + $0x38] sm:$0xff]
          %v888 = vld [vmem:[%s2 + $0x6] sm:$0x1]
          %v889 = vlaneseq
          %v890 = vshrl.u32 %v889, 7
          %v891 = vsub.s32 0, %v890
          %v892 = vrot.slane %v888, %v891
          %v894 = vsel %vm722, %v879, 0
          %896 = vmatprep.subr.mxu0 0.0
          %897 = vmatpush1.msra.mxu0 0.0
          %898 = vmatprep.subr.mxu0 0.0
          %899 = vmatpush1.msra.mxu0 0.0
          %900 = vmatprep.subr.mxu0 0.0
          %901 = vmatpush1.msra.mxu0 0.0
          %902 = vmatprep.subr.mxu0 0.0
          %903 = vmatpush1.msra.mxu0 0.0
          %904 = vmatprep.subr.mxu0 0.0
          %905 = vmatpush1.msra.mxu0 0.0
          %906 = vmatprep.subr.mxu0 0.0
          %907 = vmatpush1.msra.mxu0 0.0
          %908 = vmatprep.subr.mxu0 0.0
          %909 = vmatpush1.msra.mxu0 0.0
          %910 = vmatprep.subr.mxu0 0.0
          %911 = vmatpush1.msra.mxu0 0.0
          %912 = vmatprep.subr.mxu0 0.0
          %913 = vmatpush1.msra.mxu0 %v887
          %914 = vmatprep.subr.mxu0 0.0
          %915 = vmatpush1.msra.mxu0 %v886
          %916 = vmatprep.subr.mxu0 0.0
          %917 = vmatpush1.msra.mxu0 %v885
          %918 = vmatprep.subr.mxu0 0.0
          %919 = vmatpush1.msra.mxu0 %v884
          %920 = vmatprep.subr.mxu0 0.0
          %921 = vmatpush1.msra.mxu0 %v883
          %922 = vmatprep.subr.mxu0 0.0
          %923 = vmatpush1.msra.mxu0 %v882
          %924 = vmatprep.subr.mxu0 0.0
          %925 = vmatpush1.msra.mxu0 %v881
          %926 = vmatprep.subr.mxu0 0.0
          %927 = vmatpush1.msra.mxu0 %v880
          %928 = vmatprep.subr.mxu0 0.0
          %929 = vmatpush2.msra.mxu0 0.0
          %930 = vmatprep.subr.mxu0 0.0
          %931 = vmatpush2.msra.mxu0 0.0
          %932 = vmatprep.subr.mxu0 0.0
          %933 = vmatpush2.msra.mxu0 0.0
          %934 = vmatprep.subr.mxu0 0.0
          %935 = vmatpush2.msra.mxu0 0.0
          %936 = vmatprep.subr.mxu0 0.0
          %937 = vmatpush2.msra.mxu0 0.0
          %938 = vmatprep.subr.mxu0 0.0
          %939 = vmatpush2.msra.mxu0 0.0
          %940 = vmatprep.subr.mxu0 0.0
          %941 = vmatpush2.msra.mxu0 0.0
          %942 = vmatprep.subr.mxu0 0.0
          %943 = vmatpush2.msra.mxu0 0.0
          %944 = vmatprep.subr.mxu0 0.0
          %945 = vmatpush2.msra.mxu0 0.0
          %946 = vmatprep.subr.mxu0 0.0
          %947 = vmatpush2.msra.mxu0 0.0
          %948 = vmatprep.subr.mxu0 0.0
          %949 = vmatpush2.msra.mxu0 0.0
          %950 = vmatprep.subr.mxu0 0.0
          %951 = vmatpush2.msra.mxu0 0.0
          %952 = vmatprep.subr.mxu0 0.0
          %953 = vmatpush2.msra.mxu0 0.0
          %954 = vmatprep.subr.mxu0 0.0
          %955 = vmatpush2.msra.mxu0 0.0
          %956 = vmatprep.subr.mxu0 0.0
          %957 = vmatpush2.msra.mxu0 0.0
          %958 = vmatprep.subr.mxu0 0.0
          %959 = vmatpush2.msra.mxu0 0.0
          %960 = vmatprep.mubr.f32.mxu0 0.0
          %961 = vmatmul.mubr.f32.gmra.mxu0 %v894
          %v962 = vpop.f32.mrf.mxu0
          %v963 = vadd.f32 %v892, %v962
          %v964 = vpop.f32.mrf.mxu0
          %965 = vdwg.mxu0
          %v966 = vadd.f32 %v963, %v753
          %v967 = vadd.f32 %v966, %v879
          %v968 = vxor.u32 %v967, 2147483648
          %v969 = vmul.f32 %v968, 1.442695
          %v970 = vpow.pop %v969
          %v971 = vadd.f32 %v970, 1.0
          %v972 = vrcp.pop %v971
          %v973 = vmul.f32 1.0, %v972
          %v974 = vmul.f32 %v967, %v973
          %v975 = vld [vmem:[%s2 + $0x7] sm:$0x1]
          %v976 = vld [vmem:[%s2 + $0x8] sm:$0x1]
          %v977 = vsel %vm722, %v974, 0.0
          %978 = vadd.xlane.f32.xlu0 %v977
          %v979 = vpop.xlane.xlu0 %978
          %v980 = vmul.f32 %v979, %v726
          %v981 = vsub.f32 %v974, %v980
          %v982 = vmul.f32 %v981, %v981
          %v983 = vsel %vm722, %v982, 0.0
          %984 = vadd.xlane.f32.xlu0 %v983
          %v985 = vpop.xlane.xlu0 %984
          %v986 = vmul.f32 %v985, %v726
          %v987 = vadd.f32 %v986, 0.1
          %v988 = vrsqrt.pop %v987
          %v989 = vmul.f32 %v987, %v988
          %vm990 = vcmp.eq.f32.partialorder %v987, inf
          %v991 = vsel %vm990, %v987, %v989
          %vm992 = vcmp.eq.f32.partialorder %v987, 0.0
          %v993 = vand.u32 %v987, 2147483648
          %v994 = vsel %vm992, %v993, %v991
          %v995 = vrcp.pop %v994
          %v996 = vmul.f32 %v981, %v995
          %v997 = vlaneseq
          %v998 = vshrl.u32 %v997, 7
          %v999 = vsub.s32 0, %v998
          %v1000 = vrot.slane %v975, %v999
          %v1001 = vmul.f32 %v996, %v1000
          %v1002 = vlaneseq
          %v1003 = vshrl.u32 %v1002, 7
          %v1004 = vsub.s32 0, %v1003
          %v1005 = vrot.slane %v976, %v1004
          %v1006 = vadd.f32 %v1001, %v1005
          %v1007 = vld [vmem:[%s5] sm:$0xff]
          %v1008 = vld [vmem:[%s5 + $0x8] sm:$0xff]
          %v1009 = vld [vmem:[%s5 + $0x10] sm:$0xff]
          %v1010 = vld [vmem:[%s5 + $0x18] sm:$0xff]
          %v1011 = vld [vmem:[%s5 + $0x20] sm:$0xff]
          %v1012 = vld [vmem:[%s5 + $0x28] sm:$0xff]
          %v1013 = vld [vmem:[%s5 + $0x30] sm:$0xff]
          %v1014 = vld [vmem:[%s5 + $0x38] sm:$0xff]
          %v1015 = vld [vmem:[%s2 + $0x9] sm:$0x1]
          %v1016 = vlaneseq
          %v1017 = vshrl.u32 %v1016, 7
          %v1018 = vsub.s32 0, %v1017
          %v1019 = vrot.slane %v1015, %v1018
          %v1021 = vsel %vm722, %v1006, 0
          %1023 = vmatprep.subr.mxu0 0.0
          %1024 = vmatpush1.msra.mxu0 0.0
          %1025 = vmatprep.subr.mxu0 0.0
          %1026 = vmatpush1.msra.mxu0 0.0
          %1027 = vmatprep.subr.mxu0 0.0
          %1028 = vmatpush1.msra.mxu0 0.0
          %1029 = vmatprep.subr.mxu0 0.0
          %1030 = vmatpush1.msra.mxu0 0.0
          %1031 = vmatprep.subr.mxu0 0.0
          %1032 = vmatpush1.msra.mxu0 0.0
          %1033 = vmatprep.subr.mxu0 0.0
          %1034 = vmatpush1.msra.mxu0 0.0
          %1035 = vmatprep.subr.mxu0 0.0
          %1036 = vmatpush1.msra.mxu0 0.0
          %1037 = vmatprep.subr.mxu0 0.0
          %1038 = vmatpush1.msra.mxu0 0.0
          %1039 = vmatprep.subr.mxu0 0.0
          %1040 = vmatpush1.msra.mxu0 %v1014
          %1041 = vmatprep.subr.mxu0 0.0
          %1042 = vmatpush1.msra.mxu0 %v1013
          %1043 = vmatprep.subr.mxu0 0.0
          %1044 = vmatpush1.msra.mxu0 %v1012
          %1045 = vmatprep.subr.mxu0 0.0
          %1046 = vmatpush1.msra.mxu0 %v1011
          %1047 = vmatprep.subr.mxu0 0.0
          %1048 = vmatpush1.msra.mxu0 %v1010
          %1049 = vmatprep.subr.mxu0 0.0
          %1050 = vmatpush1.msra.mxu0 %v1009
          %1051 = vmatprep.subr.mxu0 0.0
          %1052 = vmatpush1.msra.mxu0 %v1008
          %1053 = vmatprep.subr.mxu0 0.0
          %1054 = vmatpush1.msra.mxu0 %v1007
          %1055 = vmatprep.subr.mxu0 0.0
          %1056 = vmatpush2.msra.mxu0 0.0
          %1057 = vmatprep.subr.mxu0 0.0
          %1058 = vmatpush2.msra.mxu0 0.0
          %1059 = vmatprep.subr.mxu0 0.0
          %1060 = vmatpush2.msra.mxu0 0.0
          %1061 = vmatprep.subr.mxu0 0.0
          %1062 = vmatpush2.msra.mxu0 0.0
          %1063 = vmatprep.subr.mxu0 0.0
          %1064 = vmatpush2.msra.mxu0 0.0
          %1065 = vmatprep.subr.mxu0 0.0
          %1066 = vmatpush2.msra.mxu0 0.0
          %1067 = vmatprep.subr.mxu0 0.0
          %1068 = vmatpush2.msra.mxu0 0.0
          %1069 = vmatprep.subr.mxu0 0.0
          %1070 = vmatpush2.msra.mxu0 0.0
          %1071 = vmatprep.subr.mxu0 0.0
          %1072 = vmatpush2.msra.mxu0 0.0
          %1073 = vmatprep.subr.mxu0 0.0
          %1074 = vmatpush2.msra.mxu0 0.0
          %1075 = vmatprep.subr.mxu0 0.0
          %1076 = vmatpush2.msra.mxu0 0.0
          %1077 = vmatprep.subr.mxu0 0.0
          %1078 = vmatpush2.msra.mxu0 0.0
          %1079 = vmatprep.subr.mxu0 0.0
          %1080 = vmatpush2.msra.mxu0 0.0
          %1081 = vmatprep.subr.mxu0 0.0
          %1082 = vmatpush2.msra.mxu0 0.0
          %1083 = vmatprep.subr.mxu0 0.0
          %1084 = vmatpush2.msra.mxu0 0.0
          %1085 = vmatprep.subr.mxu0 0.0
          %1086 = vmatpush2.msra.mxu0 0.0
          %1087 = vmatprep.mubr.f32.mxu0 0.0
          %1088 = vmatmul.mubr.f32.gmra.mxu0 %v1021
          %v1089 = vpop.f32.mrf.mxu0
          %v1090 = vadd.f32 %v1019, %v1089
          %v1091 = vpop.f32.mrf.mxu0
          %1092 = vdwg.mxu0
          %vm1093 = vcmask 261120
          %1094 = vst.msk [vmem:[#allocation4] sm:$0xff] %vm1093, %v1090
        $region64: #{ef_recvae_forward.1} parent=51 // pred_fallthru
          _
        %p1095 = scmp.ge.s32.totalorder %s22, 1
        // Predicated region
        $region65: #{ef_recvae_forward.1} parent=51 // pred_check
          %p1096 = pneg %p1095
        $region66: #{ef_recvae_forward.1} parent=51 // pred_check_branch
          %1098 = sbr.rel (%p1096) target = $region68
        $region67: #{ef_recvae_forward.1} parent=51 // pred_region
          %v1099 = vld [vmem:[%s429] sm:$0xff]
          %v1100 = vld [vmem:[%s429 + $0x8] sm:$0xff]
          %v1101 = vld [vmem:[%s429 + $0x10] sm:$0xff]
          %v1102 = vld [vmem:[%s429 + $0x18] sm:$0xff]
          %v1103 = vld [vmem:[%s429 + $0x20] sm:$0xff]
          %v1104 = vld [vmem:[%s429 + $0x28] sm:$0xff]
          %v1105 = vld [vmem:[%s429 + $0x30] sm:$0xff]
          %v1106 = vld [vmem:[%s429 + $0x38] sm:$0xff]
          %v1107 = vld [vmem:[%s429 + $0x40] sm:$0xff]
          %v1108 = vld [vmem:[%s429 + $0x48] sm:$0xff]
          %v1109 = vld [vmem:[%s429 + $0x50] sm:$0xff]
          %v1110 = vld [vmem:[%s429 + $0x58] sm:$0xff]
          %v1111 = vld [vmem:[%s429 + $0x60] sm:$0xff]
          %v1112 = vld [vmem:[%s429 + $0x68] sm:$0xff]
          %v1113 = vld [vmem:[%s429 + $0x70] sm:$0xff]
          %v1114 = vld [vmem:[%s429 + $0x78] sm:$0xff]
          %v1115 = vld [vmem:[%s429 + $0x80] sm:$0xff]
          %v1116 = vld [vmem:[%s429 + $0x88] sm:$0xff]
          %v1117 = vld [vmem:[%s429 + $0x90] sm:$0xff]
          %v1118 = vld [vmem:[%s429 + $0x98] sm:$0xff]
          %v1119 = vld [vmem:[%s429 + $0xa0] sm:$0xff]
          %v1120 = vld [vmem:[%s429 + $0xa8] sm:$0xff]
          %v1121 = vld [vmem:[%s429 + $0xb0] sm:$0xff]
          %v1122 = vld [vmem:[%s429 + $0xb8] sm:$0xff]
          %v1123 = vld [vmem:[%s429 + $0xc0] sm:$0xff]
          %v1124 = vld [vmem:[%s429 + $0xc8] sm:$0xff]
          %v1125 = vld [vmem:[%s429 + $0xd0] sm:$0xff]
          %v1126 = vld [vmem:[%s429 + $0xd8] sm:$0xff]
          %v1127 = vld [vmem:[%s429 + $0xe0] sm:$0xff]
          %v1128 = vld [vmem:[%s429 + $0xe8] sm:$0xff]
          %v1129 = vld [vmem:[%s429 + $0xf0] sm:$0xff]
          %v1130 = vld [vmem:[%s429 + $0xf8] sm:$0xff]
          %v1131 = vld [vmem:[%s429 + $0x100] sm:$0xff]
          %v1132 = vld [vmem:[%s429 + $0x108] sm:$0xff]
          %v1133 = vld [vmem:[%s429 + $0x110] sm:$0xff]
          %v1134 = vld [vmem:[%s429 + $0x118] sm:$0xff]
          %v1135 = vld [vmem:[%s429 + $0x120] sm:$0xff]
          %v1136 = vld [vmem:[%s429 + $0x128] sm:$0xff]
          %v1137 = vld [vmem:[%s429 + $0x130] sm:$0xff]
          %v1138 = vld [vmem:[%s429 + $0x138] sm:$0xff]
          %v1139 = vld [vmem:[%s429 + $0x140] sm:$0xff]
          %v1140 = vld [vmem:[%s429 + $0x148] sm:$0xff]
          %v1141 = vld [vmem:[%s429 + $0x150] sm:$0xff]
          %v1142 = vld [vmem:[%s429 + $0x158] sm:$0xff]
          %v1143 = vld [vmem:[%s429 + $0x160] sm:$0xff]
          %v1144 = vld [vmem:[%s429 + $0x168] sm:$0xff]
          %v1145 = vld [vmem:[%s429 + $0x170] sm:$0xff]
          %v1146 = vld [vmem:[%s429 + $0x178] sm:$0xff]
          %v1147 = vld [vmem:[%s429 + $0x180] sm:$0xff]
          %v1148 = vld [vmem:[%s429 + $0x188] sm:$0xff]
          %v1149 = vld [vmem:[%s429 + $0x190] sm:$0xff]
          %v1150 = vld [vmem:[%s429 + $0x198] sm:$0xff]
          %v1151 = vld [vmem:[%s429 + $0x1a0] sm:$0xff]
          %v1152 = vld [vmem:[%s429 + $0x1a8] sm:$0xff]
          %v1153 = vld [vmem:[%s429 + $0x1b0] sm:$0xff]
          %v1154 = vld [vmem:[%s429 + $0x1b8] sm:$0xff]
          %v1155 = vld [vmem:[%s429 + $0x1c0] sm:$0xff]
          %v1156 = vld [vmem:[%s429 + $0x1c8] sm:$0xff]
          %v1157 = vld [vmem:[%s429 + $0x1d0] sm:$0xff]
          %v1158 = vld [vmem:[%s429 + $0x1d8] sm:$0xff]
          %v1159 = vld [vmem:[%s429 + $0x1e0] sm:$0xff]
          %v1160 = vld [vmem:[%s429 + $0x1e8] sm:$0xff]
          %v1161 = vld [vmem:[%s429 + $0x1f0] sm:$0xff]
          %v1162 = vld [vmem:[%s429 + $0x1f8] sm:$0xff]
          %v1163 = vld [vmem:[#allocation4] sm:$0xff]
          %v1164 = vld [vmem:[%s440] sm:$0xf]
          %v1166 = vlaneseq
          %v1167 = vshrl.u32 %v1166, 7
          %v1168 = vsub.s32 0, %v1167
          %v1169 = vrot.slane %v1164, %v1168
          %v1170 = vlaneseq
          %v1171 = vshrl.u32 %v1170, 7
          %v1172 = vsub.s32 1, %v1171
          %v1173 = vrot.slane %v1164, %v1172
          %v1174 = vlaneseq
          %v1175 = vshrl.u32 %v1174, 7
          %v1176 = vsub.s32 2, %v1175
          %v1177 = vrot.slane %v1164, %v1176
          %v1178 = vlaneseq
          %v1179 = vshrl.u32 %v1178, 7
          %v1180 = vsub.s32 3, %v1179
          %v1181 = vrot.slane %v1164, %v1180
          %vm1186 = vcmask 261120
          %v1188 = vsel %vm1186, %v1163, 0
          %v1191 = vsel %vm1186, %v1099, 0
          %v1194 = vsel %vm1186, %v1100, 0
          %v1197 = vsel %vm1186, %v1101, 0
          %v1200 = vsel %vm1186, %v1102, 0
          %v1203 = vsel %vm1186, %v1103, 0
          %v1206 = vsel %vm1186, %v1104, 0
          %v1209 = vsel %vm1186, %v1105, 0
          %v1212 = vsel %vm1186, %v1106, 0
          %v1215 = vsel %vm1186, %v1107, 0
          %v1218 = vsel %vm1186, %v1108, 0
          %v1221 = vsel %vm1186, %v1109, 0
          %v1224 = vsel %vm1186, %v1110, 0
          %v1227 = vsel %vm1186, %v1111, 0
          %v1230 = vsel %vm1186, %v1112, 0
          %v1233 = vsel %vm1186, %v1113, 0
          %v1236 = vsel %vm1186, %v1114, 0
          %v1239 = vsel %vm1186, %v1115, 0
          %v1242 = vsel %vm1186, %v1116, 0
          %v1245 = vsel %vm1186, %v1117, 0
          %v1248 = vsel %vm1186, %v1118, 0
          %v1251 = vsel %vm1186, %v1119, 0
          %v1254 = vsel %vm1186, %v1120, 0
          %v1257 = vsel %vm1186, %v1121, 0
          %v1260 = vsel %vm1186, %v1122, 0
          %v1263 = vsel %vm1186, %v1123, 0
          %v1266 = vsel %vm1186, %v1124, 0
          %v1269 = vsel %vm1186, %v1125, 0
          %v1272 = vsel %vm1186, %v1126, 0
          %v1275 = vsel %vm1186, %v1127, 0
          %v1278 = vsel %vm1186, %v1128, 0
          %v1281 = vsel %vm1186, %v1129, 0
          %v1284 = vsel %vm1186, %v1130, 0
          %v1287 = vsel %vm1186, %v1131, 0
          %v1290 = vsel %vm1186, %v1132, 0
          %v1293 = vsel %vm1186, %v1133, 0
          %v1296 = vsel %vm1186, %v1134, 0
          %v1299 = vsel %vm1186, %v1135, 0
          %v1302 = vsel %vm1186, %v1136, 0
          %v1305 = vsel %vm1186, %v1137, 0
          %v1308 = vsel %vm1186, %v1138, 0
          %v1311 = vsel %vm1186, %v1139, 0
          %v1314 = vsel %vm1186, %v1140, 0
          %v1317 = vsel %vm1186, %v1141, 0
          %v1320 = vsel %vm1186, %v1142, 0
          %v1323 = vsel %vm1186, %v1143, 0
          %v1326 = vsel %vm1186, %v1144, 0
          %v1329 = vsel %vm1186, %v1145, 0
          %v1332 = vsel %vm1186, %v1146, 0
          %v1335 = vsel %vm1186, %v1147, 0
          %v1338 = vsel %vm1186, %v1148, 0
          %v1341 = vsel %vm1186, %v1149, 0
          %v1344 = vsel %vm1186, %v1150, 0
          %v1347 = vsel %vm1186, %v1151, 0
          %v1350 = vsel %vm1186, %v1152, 0
          %v1353 = vsel %vm1186, %v1153, 0
          %v1356 = vsel %vm1186, %v1154, 0
          %v1359 = vsel %vm1186, %v1155, 0
          %v1362 = vsel %vm1186, %v1156, 0
          %v1365 = vsel %vm1186, %v1157, 0
          %v1368 = vsel %vm1186, %v1158, 0
          %v1371 = vsel %vm1186, %v1159, 0
          %v1374 = vsel %vm1186, %v1160, 0
          %v1377 = vsel %vm1186, %v1161, 0
          %v1380 = vsel %vm1186, %v1162, 0
          %1382 = vmatprep.subr.mxu0 0.0
          %1383 = vmatpush1.xpose.msra.mxu0 %v1236
          %1384 = vmatprep.subr.mxu0 0.0
          %1385 = vmatpush1.xpose.msra.mxu0 %v1233
          %1386 = vmatprep.subr.mxu0 0.0
          %1387 = vmatpush1.xpose.msra.mxu0 %v1230
          %1388 = vmatprep.subr.mxu0 0.0
          %1389 = vmatpush1.xpose.msra.mxu0 %v1227
          %1390 = vmatprep.subr.mxu0 0.0
          %1391 = vmatpush1.xpose.msra.mxu0 %v1224
          %1392 = vmatprep.subr.mxu0 0.0
          %1393 = vmatpush1.xpose.msra.mxu0 %v1221
          %1394 = vmatprep.subr.mxu0 0.0
          %1395 = vmatpush1.xpose.msra.mxu0 %v1218
          %1396 = vmatprep.subr.mxu0 0.0
          %1397 = vmatpush1.xpose.msra.mxu0 %v1215
          %1398 = vmatprep.subr.mxu0 0.0
          %1399 = vmatpush1.xpose.msra.mxu0 %v1212
          %1400 = vmatprep.subr.mxu0 0.0
          %1401 = vmatpush1.xpose.msra.mxu0 %v1209
          %1402 = vmatprep.subr.mxu0 0.0
          %1403 = vmatpush1.xpose.msra.mxu0 %v1206
          %1404 = vmatprep.subr.mxu0 0.0
          %1405 = vmatpush1.xpose.msra.mxu0 %v1203
          %1406 = vmatprep.subr.mxu0 0.0
          %1407 = vmatpush1.xpose.msra.mxu0 %v1200
          %1408 = vmatprep.subr.mxu0 0.0
          %1409 = vmatpush1.xpose.msra.mxu0 %v1197
          %1410 = vmatprep.subr.mxu0 0.0
          %1411 = vmatpush1.xpose.msra.mxu0 %v1194
          %1412 = vmatprep.subr.mxu0 0.0
          %1413 = vmatpush1.xpose.msra.mxu0 %v1191
          %1414 = vmatprep.subr.mxu0 0.0
          %1415 = vmatpush2.xpose.msra.mxu0 %v1284
          %1416 = vmatprep.subr.mxu0 0.0
          %1417 = vmatpush2.xpose.msra.mxu0 %v1281
          %1418 = vmatprep.subr.mxu0 0.0
          %1419 = vmatpush2.xpose.msra.mxu0 %v1278
          %1420 = vmatprep.subr.mxu0 0.0
          %1421 = vmatpush2.xpose.msra.mxu0 %v1275
          %1422 = vmatprep.subr.mxu0 0.0
          %1423 = vmatpush2.xpose.msra.mxu0 %v1272
          %1424 = vmatprep.subr.mxu0 0.0
          %1425 = vmatpush2.xpose.msra.mxu0 %v1269
          %1426 = vmatprep.subr.mxu0 0.0
          %1427 = vmatpush2.xpose.msra.mxu0 %v1266
          %1428 = vmatprep.subr.mxu0 0.0
          %1429 = vmatpush2.xpose.msra.mxu0 %v1263
          %1430 = vmatprep.subr.mxu0 0.0
          %1431 = vmatpush2.xpose.msra.mxu0 %v1260
          %1432 = vmatprep.subr.mxu0 0.0
          %1433 = vmatpush2.xpose.msra.mxu0 %v1257
          %1434 = vmatprep.subr.mxu0 0.0
          %1435 = vmatpush2.xpose.msra.mxu0 %v1254
          %1436 = vmatprep.subr.mxu0 0.0
          %1437 = vmatpush2.xpose.msra.mxu0 %v1251
          %1438 = vmatprep.subr.mxu0 0.0
          %1439 = vmatpush2.xpose.msra.mxu0 %v1248
          %1440 = vmatprep.subr.mxu0 0.0
          %1441 = vmatpush2.xpose.msra.mxu0 %v1245
          %1442 = vmatprep.subr.mxu0 0.0
          %1443 = vmatpush2.xpose.msra.mxu0 %v1242
          %1444 = vmatprep.subr.mxu0 0.0
          %1445 = vmatpush2.xpose.msra.mxu0 %v1239
          %1446 = vmatprep.mubr.f32.mxu0 0.0
          %1447 = vmatmul.mubr.f32.gmra.mxu0 %v1188
          %v1448 = vpop.f32.mrf.mxu0
          %v1449 = vadd.f32 %v1169, %v1448
          %v1450 = vpop.f32.mrf.mxu0
          %v1451 = vadd.f32 %v1173, %v1450
          %1452 = vdwg.mxu0
          %1453 = vmatprep.subr.mxu0 0.0
          %1454 = vmatpush1.xpose.msra.mxu0 %v1332
          %1455 = vmatprep.subr.mxu0 0.0
          %1456 = vmatpush1.xpose.msra.mxu0 %v1329
          %1457 = vmatprep.subr.mxu0 0.0
          %1458 = vmatpush1.xpose.msra.mxu0 %v1326
          %1459 = vmatprep.subr.mxu0 0.0
          %1460 = vmatpush1.xpose.msra.mxu0 %v1323
          %1461 = vmatprep.subr.mxu0 0.0
          %1462 = vmatpush1.xpose.msra.mxu0 %v1320
          %1463 = vmatprep.subr.mxu0 0.0
          %1464 = vmatpush1.xpose.msra.mxu0 %v1317
          %1465 = vmatprep.subr.mxu0 0.0
          %1466 = vmatpush1.xpose.msra.mxu0 %v1314
          %1467 = vmatprep.subr.mxu0 0.0
          %1468 = vmatpush1.xpose.msra.mxu0 %v1311
          %1469 = vmatprep.subr.mxu0 0.0
          %1470 = vmatpush1.xpose.msra.mxu0 %v1308
          %1471 = vmatprep.subr.mxu0 0.0
          %1472 = vmatpush1.xpose.msra.mxu0 %v1305
          %1473 = vmatprep.subr.mxu0 0.0
          %1474 = vmatpush1.xpose.msra.mxu0 %v1302
          %1475 = vmatprep.subr.mxu0 0.0
          %1476 = vmatpush1.xpose.msra.mxu0 %v1299
          %1477 = vmatprep.subr.mxu0 0.0
          %1478 = vmatpush1.xpose.msra.mxu0 %v1296
          %1479 = vmatprep.subr.mxu0 0.0
          %1480 = vmatpush1.xpose.msra.mxu0 %v1293
          %1481 = vmatprep.subr.mxu0 0.0
          %1482 = vmatpush1.xpose.msra.mxu0 %v1290
          %1483 = vmatprep.subr.mxu0 0.0
          %1484 = vmatpush1.xpose.msra.mxu0 %v1287
          %1485 = vmatprep.subr.mxu0 0.0
          %1486 = vmatpush2.xpose.msra.mxu0 %v1380
          %1487 = vmatprep.subr.mxu0 0.0
          %1488 = vmatpush2.xpose.msra.mxu0 %v1377
          %1489 = vmatprep.subr.mxu0 0.0
          %1490 = vmatpush2.xpose.msra.mxu0 %v1374
          %1491 = vmatprep.subr.mxu0 0.0
          %1492 = vmatpush2.xpose.msra.mxu0 %v1371
          %1493 = vmatprep.subr.mxu0 0.0
          %1494 = vmatpush2.xpose.msra.mxu0 %v1368
          %1495 = vmatprep.subr.mxu0 0.0
          %1496 = vmatpush2.xpose.msra.mxu0 %v1365
          %1497 = vmatprep.subr.mxu0 0.0
          %1498 = vmatpush2.xpose.msra.mxu0 %v1362
          %1499 = vmatprep.subr.mxu0 0.0
          %1500 = vmatpush2.xpose.msra.mxu0 %v1359
          %1501 = vmatprep.subr.mxu0 0.0
          %1502 = vmatpush2.xpose.msra.mxu0 %v1356
          %1503 = vmatprep.subr.mxu0 0.0
          %1504 = vmatpush2.xpose.msra.mxu0 %v1353
          %1505 = vmatprep.subr.mxu0 0.0
          %1506 = vmatpush2.xpose.msra.mxu0 %v1350
          %1507 = vmatprep.subr.mxu0 0.0
          %1508 = vmatpush2.xpose.msra.mxu0 %v1347
          %1509 = vmatprep.subr.mxu0 0.0
          %1510 = vmatpush2.xpose.msra.mxu0 %v1344
          %1511 = vmatprep.subr.mxu0 0.0
          %1512 = vmatpush2.xpose.msra.mxu0 %v1341
          %1513 = vmatprep.subr.mxu0 0.0
          %1514 = vmatpush2.xpose.msra.mxu0 %v1338
          %1515 = vmatprep.subr.mxu0 0.0
          %1516 = vmatpush2.xpose.msra.mxu0 %v1335
          %1517 = vmatprep.mubr.f32.mxu0 0.0
          %1518 = vmatmul.mubr.f32.gmra.mxu0 %v1188
          %v1519 = vpop.f32.mrf.mxu0
          %v1520 = vadd.f32 %v1177, %v1519
          %v1521 = vpop.f32.mrf.mxu0
          %v1522 = vadd.f32 %v1181, %v1521
          %1523 = vdwg.mxu0
          %1524 = vst [vmem:[%s401] sm:$0xff] %v1449
          %1525 = vst [vmem:[%s401 + $0x8] sm:$0xff] %v1451
          %1526 = vst [vmem:[%s401 + $0x10] sm:$0xff] %v1520
          %1527 = vst [vmem:[%s401 + $0x18] sm:$0xff] %v1522
        $region68: #{ef_recvae_forward.1} parent=51 // pred_fallthru
          _
        %s1528 = sand.u32 %s244, 1
        %s1529 = scalar_lea.sflag [#allocation6], %s1528
        %s1530 = sand.u32 %s244, 1
        %s1531 = smul.addr %s1530, 32
        %s1532 = scalar_lea.vmem [#allocation5], %s1531
        // Predicated region
        $region69: #{ef_recvae_forward.1} parent=51 // pred_check
          %p1533 = pneg %p254
        $region70: #{ef_recvae_forward.1} parent=51 // pred_check_branch
          %1535 = sbr.rel (%p1533) target = $region72
        $region71: #{ef_recvae_forward.1} parent=51 // pred_region
          %s1536 = ssub.s32 %s22, 1
          %p1537 = scmp.gt.s32.totalorder %s1536, 0
          %s1538 = scalar_select %p1537, %s1536, 0
          %s1539 = smul.u32 4, %s1538
          %s1541 = ssub.s32 512, 512
          %1542 = vsyncadd %s1529, %s1541
          %s1543 = smul.addr %s1539, 128
          %s1544 = scalar_lea.hbm %s8, %s1543
          %s1546 = sshll.u32 %s1532, 4
          %s1547 = int_to_ptr.vmem [resolvable:$true] %s1546
          %1549 = dma.vmem_to_hbm [thread:$0]  %s1547, 512, %s1544, %s1529
        $region72: #{ef_recvae_forward.1} parent=51 // pred_fallthru
          _
      $region52: #{ef_recvae_forward.1} parent=5 // pred_fallthru
        _
      %p1550 = scmp.le.s32.totalorder 2, %s17
      // Predicated region
      $region73: #{ef_recvae_forward.1} parent=5 // pred_check
        %p1551 = pneg %p1550
      $region74: #{ef_recvae_forward.1} parent=5 // pred_check_branch
        %1553 = sbr.rel (%p1551) target = $region76
      $region75: #{ef_recvae_forward.1} parent=5 // pred_region
        %s1554 = ssub.s32 %s17, 2
        // Predicated region
        $region77: #{ef_recvae_forward.1} parent=75 // pred_check
          %p1555 = pneg %p260
        $region78: #{ef_recvae_forward.1} parent=75 // pred_check_branch
          %1557 = sbr.rel (%p1555) target = $region80
        $region79: #{ef_recvae_forward.1} parent=75 // pred_region
          %s1558 = sand.u32 %s245, 1
          %s1559 = scalar_lea.sflag [#allocation6], %s1558
          %s1560 = sand.u32 %s245, 1
          %s1561 = smul.addr %s1560, 32
          %s1562 = scalar_lea.vmem [#allocation5], %s1561
          %1563 = dma.done %s1559, 512
        $region80: #{ef_recvae_forward.1} parent=75 // pred_fallthru
          _
      $region76: #{ef_recvae_forward.1} parent=5 // pred_fallthru
        _
    $region6: #{ef_recvae_forward.1} parent=1 // loop_footer
      %s21 = sadd.s32 1, %s17
    $region7: #{ef_recvae_forward.1} parent=1 // loop_footer_branch
      %16 = sbr.rel target = $region3
    $region8: #{ef_recvae_forward.1} parent=1 // loop_exit
      _
    %1564 = vsyncpa [#allocation6], 1
    %s1565 = scalar_lea.sflag [#allocation6], 1
    %1566 = vsyncpa %s1565, 1

</llo_original>
